<compile_context>
chip_gen: v7x
topology: tpu7x:2x2x1
jax: 0.10.0
libtpu: 0.0.40
codegen_flags: <defaults>
</compile_context>

<pallas_src>
import jax
import jax.numpy as jnp
from jax.experimental import pallas as pl
from jax.experimental.pallas import tpu as pltpu

LANE = 128  # pad all hidden/output widths to full lanes


def _round_up(x, m):
    return ((x + m - 1) // m) * m


def mlp_kernel(x_ref, w1_ref, b1_ref, w2_ref, b2_ref,
               w3_ref, b3_ref, w4_ref, b4_ref, o_ref):
    # x arrives as float32 (single HBM pass); cast to bf16 in-register for MXU.
    x = x_ref[...].astype(jnp.bfloat16)
    # Layer 1: (TM, 3072) bf16 @ (3072, 128) bf16 -> f32 accum; bias+ReLU in f32.
    h = jnp.dot(x, w1_ref[...], preferred_element_type=jnp.float32)
    h = jnp.maximum(h + b1_ref[...], 0.0)
    # Layer 2: Linear(128p -> 128p) + ReLU   (true 64 -> 32, zero-padded)
    h = jnp.dot(h.astype(jnp.bfloat16), w2_ref[...],
                preferred_element_type=jnp.float32)
    h = jnp.maximum(h + b2_ref[...], 0.0)
    # Layer 3: Linear(128p -> 128p) + ReLU   (true 32 -> 16, zero-padded)
    h = jnp.dot(h.astype(jnp.bfloat16), w3_ref[...],
                preferred_element_type=jnp.float32)
    h = jnp.maximum(h + b3_ref[...], 0.0)
    # Layer 4: Linear(128p -> 128p), no activation (true 16 -> n_classes)
    h = jnp.dot(h.astype(jnp.bfloat16), w4_ref[...],
                preferred_element_type=jnp.float32)
    o_ref[...] = (h + b4_ref[...]).astype(o_ref.dtype)


def base_model_forward(x_nchw, params, n_classes, tm=1024):
    """x_nchw: (B, 3, 32, 32) float32. Returns (B, n_classes) float32."""
    B = x_nchw.shape[0]
    x = x_nchw.reshape(B, 32 * 32 * 3)        # view; stays f32 (cast in-kernel)
    K = x.shape[1]

    # --- Row tiling: pad to 16 only; pick TM so pad waste is < n_tiles*16 rows
    #     and (for B_pad >= 32) the grid has at least 2 steps (v7x megacore). ---
    B16 = _round_up(B, 16)
    tm_cap = _round_up(min(tm, B16), 16)
    if B16 >= 32:
        tm_cap = min(tm_cap, _round_up(pl.cdiv(B16, 2), 16))
    n_tiles = pl.cdiv(B16, tm_cap)
    TM = _round_up(pl.cdiv(B16, n_tiles), 16)
    B_pad = n_tiles * TM
    if B_pad != B:
        x = jnp.pad(x, ((0, B_pad - B), (0, 0)))

    (w1, b1), (w2, b2), (w3, b3), (w4, b4) = params

    def resident(shape):  # weight/bias block: fetched once, VMEM-resident
        return pl.BlockSpec(shape, lambda i: (0, 0))

    # Explicit VMEM budget: double-buffered f32 x tile + f32 out tile,
    # resident weights/biases (2 buffers each), plus headroom for the f32
    # intermediates / internal scratch.  Cap under v7x's 64 MiB physical VMEM.
    wb_bytes = sum(int(w.size) * w.dtype.itemsize + int(b.size) * b.dtype.itemsize
                   for (w, b) in params)
    vmem_bytes = 2 * TM * K * 4 + 2 * TM * LANE * 4 + 2 * wb_bytes + (8 << 20)
    vmem_limit = int(min(vmem_bytes, 60 << 20))

    flops = 2 * B_pad * (K * LANE + 3 * LANE * LANE)
    bytes_accessed = B_pad * K * 4 + B_pad * LANE * 4 + wb_bytes

    out = pl.pallas_call(
        mlp_kernel,
        out_shape=jax.ShapeDtypeStruct((B_pad, LANE), jnp.float32),
        grid=(n_tiles,),
        in_specs=[
            pl.BlockSpec((TM, K), lambda i: (i, 0)),     # f32 x rows stream
            resident(w1.shape), resident(b1.shape),
            resident(w2.shape), resident(b2.shape),
            resident(w3.shape), resident(b3.shape),
            resident(w4.shape), resident(b4.shape),
        ],
        out_specs=pl.BlockSpec((TM, LANE), lambda i: (i, 0)),
        compiler_params=pltpu.CompilerParams(
            dimension_semantics=("parallel",),
            vmem_limit_bytes=vmem_limit),
        cost_estimate=pl.CostEstimate(
            flops=flops, transcendentals=0, bytes_accessed=bytes_accessed),
    )(x, w1, b1, w2, b2, w3, b3, w4, b4)

    return out[:B, :n_classes]


def init_params(key, input_sz, hidden_dim, n_classes):
    """Deterministic init mirroring nn.Linear shapes of BaseModel.
    Weights stored as (in, out), zero-padded to lane-dense (multiple of 128)
    widths and cast to bf16; biases padded and kept f32."""
    dims = [input_sz, hidden_dim * 2, hidden_dim, hidden_dim // 2, n_classes]
    params = []
    for i in range(4):
        key, kw, kb = jax.random.split(key, 3)
        fan_in, fan_out = dims[i], dims[i + 1]
        bound = 1.0 / jnp.sqrt(fan_in)
        w = jax.random.uniform(kw, (fan_in, fan_out), jnp.float32, -bound, bound)
        b = jax.random.uniform(kb, (1, fan_out), jnp.float32, -bound, bound)
        in_pad = _round_up(fan_in, LANE)
        out_pad = _round_up(fan_out, LANE)
        w_p = jnp.zeros((in_pad, out_pad), jnp.float32).at[:fan_in, :fan_out].set(w)
        b_p = jnp.zeros((1, out_pad), jnp.float32).at[:, :fan_out].set(b)
        params.append((w_p.astype(jnp.bfloat16), b_p))
    return params


def reference_forward(x_nchw, params, n_classes):
    """Plain-JAX reference mirroring the kernel's bf16-input / f32-accum path."""
    h = x_nchw.reshape(x_nchw.shape[0], -1).astype(jnp.bfloat16).astype(jnp.float32)
    for i, (w, b) in enumerate(params):
        h = h @ w.astype(jnp.float32) + b
        if i < 3:
            h = jnp.maximum(h, 0.0)
            h = h.astype(jnp.bfloat16).astype(jnp.float32)
    return h[:, :n_classes]


if __name__ == "__main__":
    key = jax.random.PRNGKey(0)
    key, kx = jax.random.split(key)

    batch = 2
    input_sz = 32 * 32 * 3   # forced by .view(-1, 32*32*3) in forward
    hidden_dim = 32
    n_classes = 10

    x = jax.random.normal(kx, (batch, 3, 32, 32), jnp.float32)
    params = init_params(key, input_sz, hidden_dim, n_classes)

    out = base_model_forward(x, params, n_classes)
    jax.block_until_ready(out)
    ref = reference_forward(x, params, n_classes)
    assert out.shape == (batch, n_classes)
    assert jnp.allclose(out, ref, atol=1e-3, rtol=1e-3), \
        float(jnp.max(jnp.abs(out - ref)))

    # Exercise multiple row tiles AND a ragged (non-16-multiple) batch:
    # B=40 with tm=16 -> 3 tiles of 16 rows, 8 padded rows.
    key, kx2 = jax.random.split(key)
    x2 = jax.random.normal(kx2, (40, 3, 32, 32), jnp.float32)
    out2 = base_model_forward(x2, params, n_classes, tm=16)
    jax.block_until_ready(out2)
    ref2 = reference_forward(x2, params, n_classes)
    assert out2.shape == (40, n_classes)
    assert jnp.allclose(out2, ref2, atol=1e-3, rtol=1e-3), \
        float(jnp.max(jnp.abs(out2 - ref2)))

    print("KERNEL_OK")
</pallas_src>

<mosaic_0001>
module attributes {stable_mosaic.version = 11 : i64} {
  func.func @mlp_kernel(%arg0: i32, %arg1: memref<16x3072xf32, #tpu.memory_space<vmem>>, %arg2: memref<3072x128xbf16, #tpu.memory_space<vmem>>, %arg3: memref<1x128xf32, #tpu.memory_space<vmem>>, %arg4: memref<128x128xbf16, #tpu.memory_space<vmem>>, %arg5: memref<1x128xf32, #tpu.memory_space<vmem>>, %arg6: memref<128x128xbf16, #tpu.memory_space<vmem>>, %arg7: memref<1x128xf32, #tpu.memory_space<vmem>>, %arg8: memref<128x128xbf16, #tpu.memory_space<vmem>>, %arg9: memref<1x128xf32, #tpu.memory_space<vmem>>, %arg10: memref<16x128xf32, #tpu.memory_space<vmem>>) attributes {dimension_semantics = [#tpu.dimension_semantics<parallel>], iteration_bounds = array<i64: 1>, scalar_prefetch = 0 : i64, scratch_operands = 0 : i64, tpu.core_type = #tpu.core_type<tc>, window_params = [{transform_indices = @transform_0, window_bounds = array<i64: 16, 3072>}, {pipeline_mode = #tpu.pipeline_mode<synchronous>, transform_indices = @transform_1, window_bounds = array<i64: 3072, 128>}, {pipeline_mode = #tpu.pipeline_mode<synchronous>, transform_indices = @transform_2, window_bounds = array<i64: 1, 128>}, {pipeline_mode = #tpu.pipeline_mode<synchronous>, transform_indices = @transform_3, window_bounds = array<i64: 128, 128>}, {pipeline_mode = #tpu.pipeline_mode<synchronous>, transform_indices = @transform_4, window_bounds = array<i64: 1, 128>}, {pipeline_mode = #tpu.pipeline_mode<synchronous>, transform_indices = @transform_5, window_bounds = array<i64: 128, 128>}, {pipeline_mode = #tpu.pipeline_mode<synchronous>, transform_indices = @transform_6, window_bounds = array<i64: 1, 128>}, {pipeline_mode = #tpu.pipeline_mode<synchronous>, transform_indices = @transform_7, window_bounds = array<i64: 128, 128>}, {pipeline_mode = #tpu.pipeline_mode<synchronous>, transform_indices = @transform_8, window_bounds = array<i64: 1, 128>}, {transform_indices = @transform_9, window_bounds = array<i64: 16, 128>}]} {
    %c0 = arith.constant 0 : index
    %c0_0 = arith.constant 0 : index
    %0 = vector.load %arg1[%c0, %c0_0] : memref<16x3072xf32, #tpu.memory_space<vmem>>, vector<16x3072xf32>
    %1 = arith.truncf %0 : vector<16x3072xf32> to vector<16x3072xbf16>
    %c0_1 = arith.constant 0 : index
    %c0_2 = arith.constant 0 : index
    %2 = vector.load %arg2[%c0_1, %c0_2] : memref<3072x128xbf16, #tpu.memory_space<vmem>>, vector<3072x128xbf16>
    %cst = arith.constant dense<0.000000e+00> : vector<16x128xf32>
    %3 = tpu.matmul %1, %2, %cst {dimension_numbers = #tpu.dot_dimension_numbers<[1], [0], [0], [1], [0, 0, 1, 1], [], []>} : vector<16x3072xbf16>, vector<3072x128xbf16>, vector<16x128xf32> -> vector<16x128xf32>
    %c0_3 = arith.constant 0 : index
    %c0_4 = arith.constant 0 : index
    %4 = vector.load %arg3[%c0_3, %c0_4] : memref<1x128xf32, #tpu.memory_space<vmem>>, vector<1x128xf32>
    %5 = vector.broadcast %4 : vector<1x128xf32> to vector<16x128xf32>
    %6 = arith.addf %3, %5 : vector<16x128xf32>
    %cst_5 = arith.constant 0.000000e+00 : f32
    %7 = vector.broadcast %cst_5 : f32 to vector<16x128xf32>
    %8 = arith.maximumf %6, %7 : vector<16x128xf32>
    %9 = arith.truncf %8 : vector<16x128xf32> to vector<16x128xbf16>
    %c0_6 = arith.constant 0 : index
    %c0_7 = arith.constant 0 : index
    %10 = vector.load %arg4[%c0_6, %c0_7] : memref<128x128xbf16, #tpu.memory_space<vmem>>, vector<128x128xbf16>
    %cst_8 = arith.constant dense<0.000000e+00> : vector<16x128xf32>
    %11 = tpu.matmul %9, %10, %cst_8 {dimension_numbers = #tpu.dot_dimension_numbers<[1], [0], [0], [1], [0, 0, 1, 1], [], []>} : vector<16x128xbf16>, vector<128x128xbf16>, vector<16x128xf32> -> vector<16x128xf32>
    %c0_9 = arith.constant 0 : index
    %c0_10 = arith.constant 0 : index
    %12 = vector.load %arg5[%c0_9, %c0_10] : memref<1x128xf32, #tpu.memory_space<vmem>>, vector<1x128xf32>
    %13 = vector.broadcast %12 : vector<1x128xf32> to vector<16x128xf32>
    %14 = arith.addf %11, %13 : vector<16x128xf32>
    %cst_11 = arith.constant 0.000000e+00 : f32
    %15 = vector.broadcast %cst_11 : f32 to vector<16x128xf32>
    %16 = arith.maximumf %14, %15 : vector<16x128xf32>
    %17 = arith.truncf %16 : vector<16x128xf32> to vector<16x128xbf16>
    %c0_12 = arith.constant 0 : index
    %c0_13 = arith.constant 0 : index
    %18 = vector.load %arg6[%c0_12, %c0_13] : memref<128x128xbf16, #tpu.memory_space<vmem>>, vector<128x128xbf16>
    %cst_14 = arith.constant dense<0.000000e+00> : vector<16x128xf32>
    %19 = tpu.matmul %17, %18, %cst_14 {dimension_numbers = #tpu.dot_dimension_numbers<[1], [0], [0], [1], [0, 0, 1, 1], [], []>} : vector<16x128xbf16>, vector<128x128xbf16>, vector<16x128xf32> -> vector<16x128xf32>
    %c0_15 = arith.constant 0 : index
    %c0_16 = arith.constant 0 : index
    %20 = vector.load %arg7[%c0_15, %c0_16] : memref<1x128xf32, #tpu.memory_space<vmem>>, vector<1x128xf32>
    %21 = vector.broadcast %20 : vector<1x128xf32> to vector<16x128xf32>
    %22 = arith.addf %19, %21 : vector<16x128xf32>
    %cst_17 = arith.constant 0.000000e+00 : f32
    %23 = vector.broadcast %cst_17 : f32 to vector<16x128xf32>
    %24 = arith.maximumf %22, %23 : vector<16x128xf32>
    %25 = arith.truncf %24 : vector<16x128xf32> to vector<16x128xbf16>
    %c0_18 = arith.constant 0 : index
    %c0_19 = arith.constant 0 : index
    %26 = vector.load %arg8[%c0_18, %c0_19] : memref<128x128xbf16, #tpu.memory_space<vmem>>, vector<128x128xbf16>
    %cst_20 = arith.constant dense<0.000000e+00> : vector<16x128xf32>
    %27 = tpu.matmul %25, %26, %cst_20 {dimension_numbers = #tpu.dot_dimension_numbers<[1], [0], [0], [1], [0, 0, 1, 1], [], []>} : vector<16x128xbf16>, vector<128x128xbf16>, vector<16x128xf32> -> vector<16x128xf32>
    %c0_21 = arith.constant 0 : index
    %c0_22 = arith.constant 0 : index
    %28 = vector.load %arg9[%c0_21, %c0_22] : memref<1x128xf32, #tpu.memory_space<vmem>>, vector<1x128xf32>
    %29 = vector.broadcast %28 : vector<1x128xf32> to vector<16x128xf32>
    %30 = arith.addf %27, %29 : vector<16x128xf32>
    %c0_23 = arith.constant 0 : index
    %c0_24 = arith.constant 0 : index
    %31 = vector.load %arg10[%c0_23, %c0_24] : memref<16x128xf32, #tpu.memory_space<vmem>>, vector<16x128xf32>
    tpu.vector_store %arg10[%c0_23, %c0_24], %30 {strides = array<i32>} : memref<16x128xf32, #tpu.memory_space<vmem>>, vector<16x128xf32>,
    return
  }
  func.func @transform_0(%arg0: i32) -> (i32, i32) {
    %c0_i32 = arith.constant 0 : i32
    %c0_i32_0 = arith.constant 0 : i32
    return %arg0, %c0_i32 : i32, i32
  }
  func.func @transform_1(%arg0: i32) -> (i32, i32) {
    %c0_i32 = arith.constant 0 : i32
    %c0_i32_0 = arith.constant 0 : i32
    %c0_i32_1 = arith.constant 0 : i32
    return %c0_i32, %c0_i32_0 : i32, i32
  }
  func.func @transform_2(%arg0: i32) -> (i32, i32) {
    %c0_i32 = arith.constant 0 : i32
    %c0_i32_0 = arith.constant 0 : i32
    %c0_i32_1 = arith.constant 0 : i32
    return %c0_i32, %c0_i32_0 : i32, i32
  }
  func.func @transform_3(%arg0: i32) -> (i32, i32) {
    %c0_i32 = arith.constant 0 : i32
    %c0_i32_0 = arith.constant 0 : i32
    %c0_i32_1 = arith.constant 0 : i32
    return %c0_i32, %c0_i32_0 : i32, i32
  }
  func.func @transform_4(%arg0: i32) -> (i32, i32) {
    %c0_i32 = arith.constant 0 : i32
    %c0_i32_0 = arith.constant 0 : i32
    %c0_i32_1 = arith.constant 0 : i32
    return %c0_i32, %c0_i32_0 : i32, i32
  }
  func.func @transform_5(%arg0: i32) -> (i32, i32) {
    %c0_i32 = arith.constant 0 : i32
    %c0_i32_0 = arith.constant 0 : i32
    %c0_i32_1 = arith.constant 0 : i32
    return %c0_i32, %c0_i32_0 : i32, i32
  }
  func.func @transform_6(%arg0: i32) -> (i32, i32) {
    %c0_i32 = arith.constant 0 : i32
    %c0_i32_0 = arith.constant 0 : i32
    %c0_i32_1 = arith.constant 0 : i32
    return %c0_i32, %c0_i32_0 : i32, i32
  }
  func.func @transform_7(%arg0: i32) -> (i32, i32) {
    %c0_i32 = arith.constant 0 : i32
    %c0_i32_0 = arith.constant 0 : i32
    %c0_i32_1 = arith.constant 0 : i32
    return %c0_i32, %c0_i32_0 : i32, i32
  }
  func.func @transform_8(%arg0: i32) -> (i32, i32) {
    %c0_i32 = arith.constant 0 : i32
    %c0_i32_0 = arith.constant 0 : i32
    %c0_i32_1 = arith.constant 0 : i32
    return %c0_i32, %c0_i32_0 : i32, i32
  }
  func.func @transform_9(%arg0: i32) -> (i32, i32) {
    %c0_i32 = arith.constant 0 : i32
    %c0_i32_0 = arith.constant 0 : i32
    return %arg0, %c0_i32 : i32, i32
  }
}

</mosaic_0001>

<llo_original>
// kernel: tpu_custom_call.1
$region0: #{tpu_custom_call.1}
  #allocation0 [shape = 'u32[]', space=smem, size = 0x4, offset = 0x4, fixed_abs, tag = 'smem constant byte address 0x4 - core index']
  #allocation1 [shape = 'u32[144,128]{1,0:T(1,128)}', space=vmem, size = 0x12000, scoped, tag = 'internal scratch']
  %s0 = inlined_call_operand.hbm [shape: f32[16,3072], index: 0, kind: input, shape index: {}]
  %s1 = inlined_call_operand.hbm [shape: bf16[3072,128], index: 1, kind: input, shape index: {}]
  %s2 = inlined_call_operand.vmem [shape: f32[1,128], index: 2, kind: input, shape index: {}]
  %s3 = inlined_call_operand.hbm [shape: bf16[128,128], index: 3, kind: input, shape index: {}]
  %s4 = inlined_call_operand.vmem [shape: f32[1,128], index: 4, kind: input, shape index: {}]
  %s5 = inlined_call_operand.hbm [shape: bf16[128,128], index: 5, kind: input, shape index: {}]
  %s6 = inlined_call_operand.vmem [shape: f32[1,128], index: 6, kind: input, shape index: {}]
  %s7 = inlined_call_operand.hbm [shape: bf16[128,128], index: 7, kind: input, shape index: {}]
  %s8 = inlined_call_operand.vmem [shape: f32[1,128], index: 8, kind: input, shape index: {}]
  %s9 = inlined_call_operand.hbm [shape: f32[16,128], index: 9, kind: output, shape index: {}]
  %s10 = sld [smem:[#allocation0]]
  $region66: #{tpu_custom_call.1} parent=0
    _
  %s12 = ssub.s32 1, %s10
  %s13 = scalar_select 0, %s12, %s10
  $region1: #{tpu_custom_call.1} parent=0
    #allocation2 [shape = 'u8[196608]{0}', space=vmem, size = 0x30000, scoped, tag = 'input window, operand 0, single buffered']
    #allocation3 [shape = 's32[1]{0}', space=sflag, size = 0x4, scoped, tag = 'scoped memory for tpu_custom_call.1']
    #allocation4 [shape = 's32[1]{0}', space=sflag, size = 0x4, scoped, tag = 'scoped memory for tpu_custom_call.1']
    #allocation5 [shape = 'u8[786432]{0}', space=vmem, size = 0xc0000, scoped, tag = 'input window, operand 1, single buffered']
    #allocation6 [shape = 's32[1]{0}', space=sflag, size = 0x4, scoped, tag = 'scoped memory for tpu_custom_call.1']
    #allocation7 [shape = 'u8[32768]{0}', space=vmem, size = 0x8000, scoped, tag = 'input window, operand 3, single buffered']
    #allocation8 [shape = 'u8[32768]{0}', space=vmem, size = 0x8000, scoped, tag = 'input window, operand 5, single buffered']
    #allocation9 [shape = 's32[1]{0}', space=sflag, size = 0x4, scoped, tag = 'scoped memory for tpu_custom_call.1']
    #allocation10 [shape = 'u8[32768]{0}', space=vmem, size = 0x8000, scoped, tag = 'input window, operand 7, single buffered']
    #allocation11 [shape = 'u8[8192]{0}', space=vmem, size = 0x2000, scoped, tag = 'output window, operand 0, single buffered']
    %14 = vsyncpa [#allocation3], 0
    %15 = vsyncpa [#allocation6], 0
    %16 = vsyncpa [#allocation9], 0
    %17 = vsyncpa [#allocation4], 0
    // Predicated region
    $region2: #{tpu_custom_call.1} parent=1 // pred_check
      _
    $region3: #{tpu_custom_call.1} parent=1 // pred_check_branch
      %19 = sbr.rel (0) target = $region5
    $region4: #{tpu_custom_call.1} parent=1 // pred_region
      %s21 = ssub.s32 6144, 6144
      %22 = vsyncadd [#allocation3], %s21
      %s23 = sshll.u32 [#allocation2], 4
      %s24 = int_to_ptr.vmem [resolvable:$true] %s23
      %29 = dma.hbm_to_vmem [thread:$0]  %s0, 6144, %s24, [#allocation3], 3072, 3072, 192
    $region5: #{tpu_custom_call.1} parent=1 // pred_fallthru
      _
    // Predicated region
    $region6: #{tpu_custom_call.1} parent=1 // pred_check
      _
    $region7: #{tpu_custom_call.1} parent=1 // pred_check_branch
      %31 = sbr.rel (0) target = $region9
    $region8: #{tpu_custom_call.1} parent=1 // pred_region
      %s33 = ssub.s32 24576, 24576
      %34 = vsyncadd [#allocation6], %s33
      %s35 = sshll.u32 [#allocation5], 4
      %s36 = int_to_ptr.vmem [resolvable:$true] %s35
      %41 = dma.hbm_to_vmem [thread:$0]  %s1, 24576, %s36, [#allocation6], 64, 64, 4
    $region9: #{tpu_custom_call.1} parent=1 // pred_fallthru
      _
    // Predicated region
    $region10: #{tpu_custom_call.1} parent=1 // pred_check
      _
    $region11: #{tpu_custom_call.1} parent=1 // pred_check_branch
      %43 = sbr.rel (0) target = $region13
    $region12: #{tpu_custom_call.1} parent=1 // pred_region
      _
    $region13: #{tpu_custom_call.1} parent=1 // pred_fallthru
      _
    // Predicated region
    $region14: #{tpu_custom_call.1} parent=1 // pred_check
      _
    $region15: #{tpu_custom_call.1} parent=1 // pred_check_branch
      %45 = sbr.rel (0) target = $region17
    $region16: #{tpu_custom_call.1} parent=1 // pred_region
      %s47 = ssub.s32 1024, 1024
      %48 = vsyncadd [#allocation6], %s47
      %s49 = sshll.u32 [#allocation7], 4
      %s50 = int_to_ptr.vmem [resolvable:$true] %s49
      %55 = dma.hbm_to_vmem [thread:$0]  %s3, 1024, %s50, [#allocation6], 64, 64, 4
    $region17: #{tpu_custom_call.1} parent=1 // pred_fallthru
      _
    // Predicated region
    $region18: #{tpu_custom_call.1} parent=1 // pred_check
      _
    $region19: #{tpu_custom_call.1} parent=1 // pred_check_branch
      %57 = sbr.rel (0) target = $region21
    $region20: #{tpu_custom_call.1} parent=1 // pred_region
      _
    $region21: #{tpu_custom_call.1} parent=1 // pred_fallthru
      _
    // Predicated region
    $region22: #{tpu_custom_call.1} parent=1 // pred_check
      _
    $region23: #{tpu_custom_call.1} parent=1 // pred_check_branch
      %59 = sbr.rel (0) target = $region25
    $region24: #{tpu_custom_call.1} parent=1 // pred_region
      %s61 = ssub.s32 1024, 1024
      %62 = vsyncadd [#allocation9], %s61
      %s63 = sshll.u32 [#allocation8], 4
      %s64 = int_to_ptr.vmem [resolvable:$true] %s63
      %69 = dma.hbm_to_vmem [thread:$0]  %s5, 1024, %s64, [#allocation9], 64, 64, 4
    $region25: #{tpu_custom_call.1} parent=1 // pred_fallthru
      _
    // Predicated region
    $region26: #{tpu_custom_call.1} parent=1 // pred_check
      _
    $region27: #{tpu_custom_call.1} parent=1 // pred_check_branch
      %71 = sbr.rel (0) target = $region29
    $region28: #{tpu_custom_call.1} parent=1 // pred_region
      _
    $region29: #{tpu_custom_call.1} parent=1 // pred_fallthru
      _
    // Predicated region
    $region30: #{tpu_custom_call.1} parent=1 // pred_check
      _
    $region31: #{tpu_custom_call.1} parent=1 // pred_check_branch
      %73 = sbr.rel (0) target = $region33
    $region32: #{tpu_custom_call.1} parent=1 // pred_region
      %s75 = ssub.s32 1024, 1024
      %76 = vsyncadd [#allocation9], %s75
      %s77 = sshll.u32 [#allocation10], 4
      %s78 = int_to_ptr.vmem [resolvable:$true] %s77
      %83 = dma.hbm_to_vmem [thread:$0]  %s7, 1024, %s78, [#allocation9], 64, 64, 4
    $region33: #{tpu_custom_call.1} parent=1 // pred_fallthru
      _
    // Predicated region
    $region34: #{tpu_custom_call.1} parent=1 // pred_check
      _
    $region35: #{tpu_custom_call.1} parent=1 // pred_check_branch
      %85 = sbr.rel (0) target = $region37
    $region36: #{tpu_custom_call.1} parent=1 // pred_region
      _
    $region37: #{tpu_custom_call.1} parent=1 // pred_fallthru
      _
    // Predicated region
    $region38: #{tpu_custom_call.1} parent=1 // pred_check
      _
    $region39: #{tpu_custom_call.1} parent=1 // pred_check_branch
      %87 = sbr.rel (0) target = $region41
    $region40: #{tpu_custom_call.1} parent=1 // pred_region
      %88 = dma.done [#allocation3], 6144
    $region41: #{tpu_custom_call.1} parent=1 // pred_fallthru
      _
    // Predicated region
    $region42: #{tpu_custom_call.1} parent=1 // pred_check
      _
    $region43: #{tpu_custom_call.1} parent=1 // pred_check_branch
      %90 = sbr.rel (0) target = $region45
    $region44: #{tpu_custom_call.1} parent=1 // pred_region
      %91 = dma.done [#allocation6], 24576
    $region45: #{tpu_custom_call.1} parent=1 // pred_fallthru
      _
    // Predicated region
    $region46: #{tpu_custom_call.1} parent=1 // pred_check
      _
    $region47: #{tpu_custom_call.1} parent=1 // pred_check_branch
      %93 = sbr.rel (0) target = $region49
    $region48: #{tpu_custom_call.1} parent=1 // pred_region
      %94 = dma.done [#allocation6], 1024
    $region49: #{tpu_custom_call.1} parent=1 // pred_fallthru
      _
    // Predicated region
    $region50: #{tpu_custom_call.1} parent=1 // pred_check
      _
    $region51: #{tpu_custom_call.1} parent=1 // pred_check_branch
      %96 = sbr.rel (0) target = $region53
    $region52: #{tpu_custom_call.1} parent=1 // pred_region
      %97 = dma.done [#allocation9], 1024
    $region53: #{tpu_custom_call.1} parent=1 // pred_fallthru
      _
    // Predicated region
    $region54: #{tpu_custom_call.1} parent=1 // pred_check
      _
    $region55: #{tpu_custom_call.1} parent=1 // pred_check_branch
      %99 = sbr.rel (0) target = $region57
    $region56: #{tpu_custom_call.1} parent=1 // pred_region
      %100 = dma.done [#allocation9], 1024
    $region57: #{tpu_custom_call.1} parent=1 // pred_fallthru
      _
    %v102 = vld [vmem:[#allocation2] sm:$0xff]
    %v103 = vld [vmem:[#allocation2 + $0x8] sm:$0xff]
    %v104 = vld [vmem:[#allocation2 + $0x10] sm:$0xff]
    %v105 = vld [vmem:[#allocation2 + $0x18] sm:$0xff]
    %v106 = vld [vmem:[#allocation2 + $0x20] sm:$0xff]
    %v107 = vld [vmem:[#allocation2 + $0x28] sm:$0xff]
    %v108 = vld [vmem:[#allocation2 + $0x30] sm:$0xff]
    %v109 = vld [vmem:[#allocation2 + $0x38] sm:$0xff]
    %v110 = vld [vmem:[#allocation2 + $0x40] sm:$0xff]
    %v111 = vld [vmem:[#allocation2 + $0x48] sm:$0xff]
    %v112 = vld [vmem:[#allocation2 + $0x50] sm:$0xff]
    %v113 = vld [vmem:[#allocation2 + $0x58] sm:$0xff]
    %v114 = vld [vmem:[#allocation2 + $0x60] sm:$0xff]
    %v115 = vld [vmem:[#allocation2 + $0x68] sm:$0xff]
    %v116 = vld [vmem:[#allocation2 + $0x70] sm:$0xff]
    %v117 = vld [vmem:[#allocation2 + $0x78] sm:$0xff]
    %v118 = vld [vmem:[#allocation2 + $0x80] sm:$0xff]
    %v119 = vld [vmem:[#allocation2 + $0x88] sm:$0xff]
    %v120 = vld [vmem:[#allocation2 + $0x90] sm:$0xff]
    %v121 = vld [vmem:[#allocation2 + $0x98] sm:$0xff]
    %v122 = vld [vmem:[#allocation2 + $0xa0] sm:$0xff]
    %v123 = vld [vmem:[#allocation2 + $0xa8] sm:$0xff]
    %v124 = vld [vmem:[#allocation2 + $0xb0] sm:$0xff]
    %v125 = vld [vmem:[#allocation2 + $0xb8] sm:$0xff]
    %v126 = vld [vmem:[#allocation2 + $0xc0] sm:$0xff]
    %v127 = vld [vmem:[#allocation2 + $0xc8] sm:$0xff]
    %v128 = vld [vmem:[#allocation2 + $0xd0] sm:$0xff]
    %v129 = vld [vmem:[#allocation2 + $0xd8] sm:$0xff]
    %v130 = vld [vmem:[#allocation2 + $0xe0] sm:$0xff]
    %v131 = vld [vmem:[#allocation2 + $0xe8] sm:$0xff]
    %v132 = vld [vmem:[#allocation2 + $0xf0] sm:$0xff]
    %v133 = vld [vmem:[#allocation2 + $0xf8] sm:$0xff]
    %v134 = vld [vmem:[#allocation2 + $0x100] sm:$0xff]
    %v135 = vld [vmem:[#allocation2 + $0x108] sm:$0xff]
    %v136 = vld [vmem:[#allocation2 + $0x110] sm:$0xff]
    %v137 = vld [vmem:[#allocation2 + $0x118] sm:$0xff]
    %v138 = vld [vmem:[#allocation2 + $0x120] sm:$0xff]
    %v139 = vld [vmem:[#allocation2 + $0x128] sm:$0xff]
    %v140 = vld [vmem:[#allocation2 + $0x130] sm:$0xff]
    %v141 = vld [vmem:[#allocation2 + $0x138] sm:$0xff]
    %v142 = vld [vmem:[#allocation2 + $0x140] sm:$0xff]
    %v143 = vld [vmem:[#allocation2 + $0x148] sm:$0xff]
    %v144 = vld [vmem:[#allocation2 + $0x150] sm:$0xff]
    %v145 = vld [vmem:[#allocation2 + $0x158] sm:$0xff]
    %v146 = vld [vmem:[#allocation2 + $0x160] sm:$0xff]
    %v147 = vld [vmem:[#allocation2 + $0x168] sm:$0xff]
    %v148 = vld [vmem:[#allocation2 + $0x170] sm:$0xff]
    %v149 = vld [vmem:[#allocation2 + $0x178] sm:$0xff]
    %v150 = vpack.c.bf16 %v126, %v102
    %v151 = vpack.c.bf16 %v127, %v103
    %v152 = vpack.c.bf16 %v128, %v104
    %v153 = vpack.c.bf16 %v129, %v105
    %v154 = vpack.c.bf16 %v130, %v106
    %v155 = vpack.c.bf16 %v131, %v107
    %v156 = vpack.c.bf16 %v132, %v108
    %v157 = vpack.c.bf16 %v133, %v109
    %v158 = vpack.c.bf16 %v134, %v110
    %v159 = vpack.c.bf16 %v135, %v111
    %v160 = vpack.c.bf16 %v136, %v112
    %v161 = vpack.c.bf16 %v137, %v113
    %v162 = vpack.c.bf16 %v138, %v114
    %v163 = vpack.c.bf16 %v139, %v115
    %v164 = vpack.c.bf16 %v140, %v116
    %v165 = vpack.c.bf16 %v141, %v117
    %v166 = vpack.c.bf16 %v142, %v118
    %v167 = vpack.c.bf16 %v143, %v119
    %v168 = vpack.c.bf16 %v144, %v120
    %v169 = vpack.c.bf16 %v145, %v121
    %v170 = vpack.c.bf16 %v146, %v122
    %v171 = vpack.c.bf16 %v147, %v123
    %v172 = vpack.c.bf16 %v148, %v124
    %v173 = vpack.c.bf16 %v149, %v125
    %v174 = vld [vmem:[#allocation5] sm:$0xf]
    %v175 = vld [vmem:[#allocation5 + $0x4] sm:$0xf]
    %v176 = vld [vmem:[#allocation5 + $0x8] sm:$0xf]
    %v177 = vld [vmem:[#allocation5 + $0xc] sm:$0xf]
    %v178 = vld [vmem:[#allocation5 + $0x10] sm:$0xf]
    %v179 = vld [vmem:[#allocation5 + $0x14] sm:$0xf]
    %v180 = vld [vmem:[#allocation5 + $0x18] sm:$0xf]
    %v181 = vld [vmem:[#allocation5 + $0x1c] sm:$0xf]
    %v182 = vld [vmem:[#allocation5 + $0x20] sm:$0xf]
    %v183 = vld [vmem:[#allocation5 + $0x24] sm:$0xf]
    %v184 = vld [vmem:[#allocation5 + $0x28] sm:$0xf]
    %v185 = vld [vmem:[#allocation5 + $0x2c] sm:$0xf]
    %v186 = vld [vmem:[#allocation5 + $0x30] sm:$0xf]
    %v187 = vld [vmem:[#allocation5 + $0x34] sm:$0xf]
    %v188 = vld [vmem:[#allocation5 + $0x38] sm:$0xf]
    %v189 = vld [vmem:[#allocation5 + $0x3c] sm:$0xf]
    %v190 = vld [vmem:[#allocation5 + $0x40] sm:$0xf]
    %v191 = vld [vmem:[#allocation5 + $0x44] sm:$0xf]
    %v192 = vld [vmem:[#allocation5 + $0x48] sm:$0xf]
    %v193 = vld [vmem:[#allocation5 + $0x4c] sm:$0xf]
    %v194 = vld [vmem:[#allocation5 + $0x50] sm:$0xf]
    %v195 = vld [vmem:[#allocation5 + $0x54] sm:$0xf]
    %v196 = vld [vmem:[#allocation5 + $0x58] sm:$0xf]
    %v197 = vld [vmem:[#allocation5 + $0x5c] sm:$0xf]
    %v198 = vld [vmem:[#allocation5 + $0x60] sm:$0xf]
    %v199 = vld [vmem:[#allocation5 + $0x64] sm:$0xf]
    %v200 = vld [vmem:[#allocation5 + $0x68] sm:$0xf]
    %v201 = vld [vmem:[#allocation5 + $0x6c] sm:$0xf]
    %v202 = vld [vmem:[#allocation5 + $0x70] sm:$0xf]
    %v203 = vld [vmem:[#allocation5 + $0x74] sm:$0xf]
    %v204 = vld [vmem:[#allocation5 + $0x78] sm:$0xf]
    %v205 = vld [vmem:[#allocation5 + $0x7c] sm:$0xf]
    %v206 = vld [vmem:[#allocation5 + $0x80] sm:$0xf]
    %v207 = vld [vmem:[#allocation5 + $0x84] sm:$0xf]
    %v208 = vld [vmem:[#allocation5 + $0x88] sm:$0xf]
    %v209 = vld [vmem:[#allocation5 + $0x8c] sm:$0xf]
    %v210 = vld [vmem:[#allocation5 + $0x90] sm:$0xf]
    %v211 = vld [vmem:[#allocation5 + $0x94] sm:$0xf]
    %v212 = vld [vmem:[#allocation5 + $0x98] sm:$0xf]
    %v213 = vld [vmem:[#allocation5 + $0x9c] sm:$0xf]
    %v214 = vld [vmem:[#allocation5 + $0xa0] sm:$0xf]
    %v215 = vld [vmem:[#allocation5 + $0xa4] sm:$0xf]
    %v216 = vld [vmem:[#allocation5 + $0xa8] sm:$0xf]
    %v217 = vld [vmem:[#allocation5 + $0xac] sm:$0xf]
    %v218 = vld [vmem:[#allocation5 + $0xb0] sm:$0xf]
    %v219 = vld [vmem:[#allocation5 + $0xb4] sm:$0xf]
    %v220 = vld [vmem:[#allocation5 + $0xb8] sm:$0xf]
    %v221 = vld [vmem:[#allocation5 + $0xbc] sm:$0xf]
    %v222 = vld [vmem:[#allocation5 + $0xc0] sm:$0xf]
    %v223 = vld [vmem:[#allocation5 + $0xc4] sm:$0xf]
    %v224 = vld [vmem:[#allocation5 + $0xc8] sm:$0xf]
    %v225 = vld [vmem:[#allocation5 + $0xcc] sm:$0xf]
    %v226 = vld [vmem:[#allocation5 + $0xd0] sm:$0xf]
    %v227 = vld [vmem:[#allocation5 + $0xd4] sm:$0xf]
    %v228 = vld [vmem:[#allocation5 + $0xd8] sm:$0xf]
    %v229 = vld [vmem:[#allocation5 + $0xdc] sm:$0xf]
    %v230 = vld [vmem:[#allocation5 + $0xe0] sm:$0xf]
    %v231 = vld [vmem:[#allocation5 + $0xe4] sm:$0xf]
    %v232 = vld [vmem:[#allocation5 + $0xe8] sm:$0xf]
    %v233 = vld [vmem:[#allocation5 + $0xec] sm:$0xf]
    %v234 = vld [vmem:[#allocation5 + $0xf0] sm:$0xf]
    %v235 = vld [vmem:[#allocation5 + $0xf4] sm:$0xf]
    %v236 = vld [vmem:[#allocation5 + $0xf8] sm:$0xf]
    %v237 = vld [vmem:[#allocation5 + $0xfc] sm:$0xf]
    %v238 = vld [vmem:[#allocation5 + $0x100] sm:$0xf]
    %v239 = vld [vmem:[#allocation5 + $0x104] sm:$0xf]
    %v240 = vld [vmem:[#allocation5 + $0x108] sm:$0xf]
    %v241 = vld [vmem:[#allocation5 + $0x10c] sm:$0xf]
    %v242 = vld [vmem:[#allocation5 + $0x110] sm:$0xf]
    %v243 = vld [vmem:[#allocation5 + $0x114] sm:$0xf]
    %v244 = vld [vmem:[#allocation5 + $0x118] sm:$0xf]
    %v245 = vld [vmem:[#allocation5 + $0x11c] sm:$0xf]
    %v246 = vld [vmem:[#allocation5 + $0x120] sm:$0xf]
    %v247 = vld [vmem:[#allocation5 + $0x124] sm:$0xf]
    %v248 = vld [vmem:[#allocation5 + $0x128] sm:$0xf]
    %v249 = vld [vmem:[#allocation5 + $0x12c] sm:$0xf]
    %v250 = vld [vmem:[#allocation5 + $0x130] sm:$0xf]
    %v251 = vld [vmem:[#allocation5 + $0x134] sm:$0xf]
    %v252 = vld [vmem:[#allocation5 + $0x138] sm:$0xf]
    %v253 = vld [vmem:[#allocation5 + $0x13c] sm:$0xf]
    %v254 = vld [vmem:[#allocation5 + $0x140] sm:$0xf]
    %v255 = vld [vmem:[#allocation5 + $0x144] sm:$0xf]
    %v256 = vld [vmem:[#allocation5 + $0x148] sm:$0xf]
    %v257 = vld [vmem:[#allocation5 + $0x14c] sm:$0xf]
    %v258 = vld [vmem:[#allocation5 + $0x150] sm:$0xf]
    %v259 = vld [vmem:[#allocation5 + $0x154] sm:$0xf]
    %v260 = vld [vmem:[#allocation5 + $0x158] sm:$0xf]
    %v261 = vld [vmem:[#allocation5 + $0x15c] sm:$0xf]
    %v262 = vld [vmem:[#allocation5 + $0x160] sm:$0xf]
    %v263 = vld [vmem:[#allocation5 + $0x164] sm:$0xf]
    %v264 = vld [vmem:[#allocation5 + $0x168] sm:$0xf]
    %v265 = vld [vmem:[#allocation5 + $0x16c] sm:$0xf]
    %v266 = vld [vmem:[#allocation5 + $0x170] sm:$0xf]
    %v267 = vld [vmem:[#allocation5 + $0x174] sm:$0xf]
    %v268 = vld [vmem:[#allocation5 + $0x178] sm:$0xf]
    %v269 = vld [vmem:[#allocation5 + $0x17c] sm:$0xf]
    %v270 = vld [vmem:[#allocation5 + $0x180] sm:$0xf]
    %v271 = vld [vmem:[#allocation5 + $0x184] sm:$0xf]
    %v272 = vld [vmem:[#allocation5 + $0x188] sm:$0xf]
    %v273 = vld [vmem:[#allocation5 + $0x18c] sm:$0xf]
    %v274 = vld [vmem:[#allocation5 + $0x190] sm:$0xf]
    %v275 = vld [vmem:[#allocation5 + $0x194] sm:$0xf]
    %v276 = vld [vmem:[#allocation5 + $0x198] sm:$0xf]
    %v277 = vld [vmem:[#allocation5 + $0x19c] sm:$0xf]
    %v278 = vld [vmem:[#allocation5 + $0x1a0] sm:$0xf]
    %v279 = vld [vmem:[#allocation5 + $0x1a4] sm:$0xf]
    %v280 = vld [vmem:[#allocation5 + $0x1a8] sm:$0xf]
    %v281 = vld [vmem:[#allocation5 + $0x1ac] sm:$0xf]
    %v282 = vld [vmem:[#allocation5 + $0x1b0] sm:$0xf]
    %v283 = vld [vmem:[#allocation5 + $0x1b4] sm:$0xf]
    %v284 = vld [vmem:[#allocation5 + $0x1b8] sm:$0xf]
    %v285 = vld [vmem:[#allocation5 + $0x1bc] sm:$0xf]
    %v286 = vld [vmem:[#allocation5 + $0x1c0] sm:$0xf]
    %v287 = vld [vmem:[#allocation5 + $0x1c4] sm:$0xf]
    %v288 = vld [vmem:[#allocation5 + $0x1c8] sm:$0xf]
    %v289 = vld [vmem:[#allocation5 + $0x1cc] sm:$0xf]
    %v290 = vld [vmem:[#allocation5 + $0x1d0] sm:$0xf]
    %v291 = vld [vmem:[#allocation5 + $0x1d4] sm:$0xf]
    %v292 = vld [vmem:[#allocation5 + $0x1d8] sm:$0xf]
    %v293 = vld [vmem:[#allocation5 + $0x1dc] sm:$0xf]
    %v294 = vld [vmem:[#allocation5 + $0x1e0] sm:$0xf]
    %v295 = vld [vmem:[#allocation5 + $0x1e4] sm:$0xf]
    %v296 = vld [vmem:[#allocation5 + $0x1e8] sm:$0xf]
    %v297 = vld [vmem:[#allocation5 + $0x1ec] sm:$0xf]
    %v298 = vld [vmem:[#allocation5 + $0x1f0] sm:$0xf]
    %v299 = vld [vmem:[#allocation5 + $0x1f4] sm:$0xf]
    %v300 = vld [vmem:[#allocation5 + $0x1f8] sm:$0xf]
    %v301 = vld [vmem:[#allocation5 + $0x1fc] sm:$0xf]
    %v302 = vld [vmem:[#allocation5 + $0x200] sm:$0xf]
    %v303 = vld [vmem:[#allocation5 + $0x204] sm:$0xf]
    %v304 = vld [vmem:[#allocation5 + $0x208] sm:$0xf]
    %v305 = vld [vmem:[#allocation5 + $0x20c] sm:$0xf]
    %v306 = vld [vmem:[#allocation5 + $0x210] sm:$0xf]
    %v307 = vld [vmem:[#allocation5 + $0x214] sm:$0xf]
    %v308 = vld [vmem:[#allocation5 + $0x218] sm:$0xf]
    %v309 = vld [vmem:[#allocation5 + $0x21c] sm:$0xf]
    %v310 = vld [vmem:[#allocation5 + $0x220] sm:$0xf]
    %v311 = vld [vmem:[#allocation5 + $0x224] sm:$0xf]
    %v312 = vld [vmem:[#allocation5 + $0x228] sm:$0xf]
    %v313 = vld [vmem:[#allocation5 + $0x22c] sm:$0xf]
    %v314 = vld [vmem:[#allocation5 + $0x230] sm:$0xf]
    %v315 = vld [vmem:[#allocation5 + $0x234] sm:$0xf]
    %v316 = vld [vmem:[#allocation5 + $0x238] sm:$0xf]
    %v317 = vld [vmem:[#allocation5 + $0x23c] sm:$0xf]
    %v318 = vld [vmem:[#allocation5 + $0x240] sm:$0xf]
    %v319 = vld [vmem:[#allocation5 + $0x244] sm:$0xf]
    %v320 = vld [vmem:[#allocation5 + $0x248] sm:$0xf]
    %v321 = vld [vmem:[#allocation5 + $0x24c] sm:$0xf]
    %v322 = vld [vmem:[#allocation5 + $0x250] sm:$0xf]
    %v323 = vld [vmem:[#allocation5 + $0x254] sm:$0xf]
    %v324 = vld [vmem:[#allocation5 + $0x258] sm:$0xf]
    %v325 = vld [vmem:[#allocation5 + $0x25c] sm:$0xf]
    %v326 = vld [vmem:[#allocation5 + $0x260] sm:$0xf]
    %v327 = vld [vmem:[#allocation5 + $0x264] sm:$0xf]
    %v328 = vld [vmem:[#allocation5 + $0x268] sm:$0xf]
    %v329 = vld [vmem:[#allocation5 + $0x26c] sm:$0xf]
    %v330 = vld [vmem:[#allocation5 + $0x270] sm:$0xf]
    %v331 = vld [vmem:[#allocation5 + $0x274] sm:$0xf]
    %v332 = vld [vmem:[#allocation5 + $0x278] sm:$0xf]
    %v333 = vld [vmem:[#allocation5 + $0x27c] sm:$0xf]
    %v334 = vld [vmem:[#allocation5 + $0x280] sm:$0xf]
    %v335 = vld [vmem:[#allocation5 + $0x284] sm:$0xf]
    %v336 = vld [vmem:[#allocation5 + $0x288] sm:$0xf]
    %v337 = vld [vmem:[#allocation5 + $0x28c] sm:$0xf]
    %v338 = vld [vmem:[#allocation5 + $0x290] sm:$0xf]
    %v339 = vld [vmem:[#allocation5 + $0x294] sm:$0xf]
    %v340 = vld [vmem:[#allocation5 + $0x298] sm:$0xf]
    %v341 = vld [vmem:[#allocation5 + $0x29c] sm:$0xf]
    %v342 = vld [vmem:[#allocation5 + $0x2a0] sm:$0xf]
    %v343 = vld [vmem:[#allocation5 + $0x2a4] sm:$0xf]
    %v344 = vld [vmem:[#allocation5 + $0x2a8] sm:$0xf]
    %v345 = vld [vmem:[#allocation5 + $0x2ac] sm:$0xf]
    %v346 = vld [vmem:[#allocation5 + $0x2b0] sm:$0xf]
    %v347 = vld [vmem:[#allocation5 + $0x2b4] sm:$0xf]
    %v348 = vld [vmem:[#allocation5 + $0x2b8] sm:$0xf]
    %v349 = vld [vmem:[#allocation5 + $0x2bc] sm:$0xf]
    %v350 = vld [vmem:[#allocation5 + $0x2c0] sm:$0xf]
    %v351 = vld [vmem:[#allocation5 + $0x2c4] sm:$0xf]
    %v352 = vld [vmem:[#allocation5 + $0x2c8] sm:$0xf]
    %v353 = vld [vmem:[#allocation5 + $0x2cc] sm:$0xf]
    %v354 = vld [vmem:[#allocation5 + $0x2d0] sm:$0xf]
    %v355 = vld [vmem:[#allocation5 + $0x2d4] sm:$0xf]
    %v356 = vld [vmem:[#allocation5 + $0x2d8] sm:$0xf]
    %v357 = vld [vmem:[#allocation5 + $0x2dc] sm:$0xf]
    %v358 = vld [vmem:[#allocation5 + $0x2e0] sm:$0xf]
    %v359 = vld [vmem:[#allocation5 + $0x2e4] sm:$0xf]
    %v360 = vld [vmem:[#allocation5 + $0x2e8] sm:$0xf]
    %v361 = vld [vmem:[#allocation5 + $0x2ec] sm:$0xf]
    %v362 = vld [vmem:[#allocation5 + $0x2f0] sm:$0xf]
    %v363 = vld [vmem:[#allocation5 + $0x2f4] sm:$0xf]
    %v364 = vld [vmem:[#allocation5 + $0x2f8] sm:$0xf]
    %v365 = vld [vmem:[#allocation5 + $0x2fc] sm:$0xf]
    %v366 = vld [vmem:[#allocation5 + $0x300] sm:$0xf]
    %v367 = vld [vmem:[#allocation5 + $0x304] sm:$0xf]
    %v368 = vld [vmem:[#allocation5 + $0x308] sm:$0xf]
    %v369 = vld [vmem:[#allocation5 + $0x30c] sm:$0xf]
    %v370 = vld [vmem:[#allocation5 + $0x310] sm:$0xf]
    %v371 = vld [vmem:[#allocation5 + $0x314] sm:$0xf]
    %v372 = vld [vmem:[#allocation5 + $0x318] sm:$0xf]
    %v373 = vld [vmem:[#allocation5 + $0x31c] sm:$0xf]
    %v374 = vld [vmem:[#allocation5 + $0x320] sm:$0xf]
    %v375 = vld [vmem:[#allocation5 + $0x324] sm:$0xf]
    %v376 = vld [vmem:[#allocation5 + $0x328] sm:$0xf]
    %v377 = vld [vmem:[#allocation5 + $0x32c] sm:$0xf]
    %v378 = vld [vmem:[#allocation5 + $0x330] sm:$0xf]
    %v379 = vld [vmem:[#allocation5 + $0x334] sm:$0xf]
    %v380 = vld [vmem:[#allocation5 + $0x338] sm:$0xf]
    %v381 = vld [vmem:[#allocation5 + $0x33c] sm:$0xf]
    %v382 = vld [vmem:[#allocation5 + $0x340] sm:$0xf]
    %v383 = vld [vmem:[#allocation5 + $0x344] sm:$0xf]
    %v384 = vld [vmem:[#allocation5 + $0x348] sm:$0xf]
    %v385 = vld [vmem:[#allocation5 + $0x34c] sm:$0xf]
    %v386 = vld [vmem:[#allocation5 + $0x350] sm:$0xf]
    %v387 = vld [vmem:[#allocation5 + $0x354] sm:$0xf]
    %v388 = vld [vmem:[#allocation5 + $0x358] sm:$0xf]
    %v389 = vld [vmem:[#allocation5 + $0x35c] sm:$0xf]
    %v390 = vld [vmem:[#allocation5 + $0x360] sm:$0xf]
    %v391 = vld [vmem:[#allocation5 + $0x364] sm:$0xf]
    %v392 = vld [vmem:[#allocation5 + $0x368] sm:$0xf]
    %v393 = vld [vmem:[#allocation5 + $0x36c] sm:$0xf]
    %v394 = vld [vmem:[#allocation5 + $0x370] sm:$0xf]
    %v395 = vld [vmem:[#allocation5 + $0x374] sm:$0xf]
    %v396 = vld [vmem:[#allocation5 + $0x378] sm:$0xf]
    %v397 = vld [vmem:[#allocation5 + $0x37c] sm:$0xf]
    %v398 = vld [vmem:[#allocation5 + $0x380] sm:$0xf]
    %v399 = vld [vmem:[#allocation5 + $0x384] sm:$0xf]
    %v400 = vld [vmem:[#allocation5 + $0x388] sm:$0xf]
    %v401 = vld [vmem:[#allocation5 + $0x38c] sm:$0xf]
    %v402 = vld [vmem:[#allocation5 + $0x390] sm:$0xf]
    %v403 = vld [vmem:[#allocation5 + $0x394] sm:$0xf]
    %v404 = vld [vmem:[#allocation5 + $0x398] sm:$0xf]
    %v405 = vld [vmem:[#allocation5 + $0x39c] sm:$0xf]
    %v406 = vld [vmem:[#allocation5 + $0x3a0] sm:$0xf]
    %v407 = vld [vmem:[#allocation5 + $0x3a4] sm:$0xf]
    %v408 = vld [vmem:[#allocation5 + $0x3a8] sm:$0xf]
    %v409 = vld [vmem:[#allocation5 + $0x3ac] sm:$0xf]
    %v410 = vld [vmem:[#allocation5 + $0x3b0] sm:$0xf]
    %v411 = vld [vmem:[#allocation5 + $0x3b4] sm:$0xf]
    %v412 = vld [vmem:[#allocation5 + $0x3b8] sm:$0xf]
    %v413 = vld [vmem:[#allocation5 + $0x3bc] sm:$0xf]
    %v414 = vld [vmem:[#allocation5 + $0x3c0] sm:$0xf]
    %v415 = vld [vmem:[#allocation5 + $0x3c4] sm:$0xf]
    %v416 = vld [vmem:[#allocation5 + $0x3c8] sm:$0xf]
    %v417 = vld [vmem:[#allocation5 + $0x3cc] sm:$0xf]
    %v418 = vld [vmem:[#allocation5 + $0x3d0] sm:$0xf]
    %v419 = vld [vmem:[#allocation5 + $0x3d4] sm:$0xf]
    %v420 = vld [vmem:[#allocation5 + $0x3d8] sm:$0xf]
    %v421 = vld [vmem:[#allocation5 + $0x3dc] sm:$0xf]
    %v422 = vld [vmem:[#allocation5 + $0x3e0] sm:$0xf]
    %v423 = vld [vmem:[#allocation5 + $0x3e4] sm:$0xf]
    %v424 = vld [vmem:[#allocation5 + $0x3e8] sm:$0xf]
    %v425 = vld [vmem:[#allocation5 + $0x3ec] sm:$0xf]
    %v426 = vld [vmem:[#allocation5 + $0x3f0] sm:$0xf]
    %v427 = vld [vmem:[#allocation5 + $0x3f4] sm:$0xf]
    %v428 = vld [vmem:[#allocation5 + $0x3f8] sm:$0xf]
    %v429 = vld [vmem:[#allocation5 + $0x3fc] sm:$0xf]
    %v430 = vld [vmem:[#allocation5 + $0x400] sm:$0xf]
    %v431 = vld [vmem:[#allocation5 + $0x404] sm:$0xf]
    %v432 = vld [vmem:[#allocation5 + $0x408] sm:$0xf]
    %v433 = vld [vmem:[#allocation5 + $0x40c] sm:$0xf]
    %v434 = vld [vmem:[#allocation5 + $0x410] sm:$0xf]
    %v435 = vld [vmem:[#allocation5 + $0x414] sm:$0xf]
    %v436 = vld [vmem:[#allocation5 + $0x418] sm:$0xf]
    %v437 = vld [vmem:[#allocation5 + $0x41c] sm:$0xf]
    %v438 = vld [vmem:[#allocation5 + $0x420] sm:$0xf]
    %v439 = vld [vmem:[#allocation5 + $0x424] sm:$0xf]
    %v440 = vld [vmem:[#allocation5 + $0x428] sm:$0xf]
    %v441 = vld [vmem:[#allocation5 + $0x42c] sm:$0xf]
    %v442 = vld [vmem:[#allocation5 + $0x430] sm:$0xf]
    %v443 = vld [vmem:[#allocation5 + $0x434] sm:$0xf]
    %v444 = vld [vmem:[#allocation5 + $0x438] sm:$0xf]
    %v445 = vld [vmem:[#allocation5 + $0x43c] sm:$0xf]
    %v446 = vld [vmem:[#allocation5 + $0x440] sm:$0xf]
    %v447 = vld [vmem:[#allocation5 + $0x444] sm:$0xf]
    %v448 = vld [vmem:[#allocation5 + $0x448] sm:$0xf]
    %v449 = vld [vmem:[#allocation5 + $0x44c] sm:$0xf]
    %v450 = vld [vmem:[#allocation5 + $0x450] sm:$0xf]
    %v451 = vld [vmem:[#allocation5 + $0x454] sm:$0xf]
    %v452 = vld [vmem:[#allocation5 + $0x458] sm:$0xf]
    %v453 = vld [vmem:[#allocation5 + $0x45c] sm:$0xf]
    %v454 = vld [vmem:[#allocation5 + $0x460] sm:$0xf]
    %v455 = vld [vmem:[#allocation5 + $0x464] sm:$0xf]
    %v456 = vld [vmem:[#allocation5 + $0x468] sm:$0xf]
    %v457 = vld [vmem:[#allocation5 + $0x46c] sm:$0xf]
    %v458 = vld [vmem:[#allocation5 + $0x470] sm:$0xf]
    %v459 = vld [vmem:[#allocation5 + $0x474] sm:$0xf]
    %v460 = vld [vmem:[#allocation5 + $0x478] sm:$0xf]
    %v461 = vld [vmem:[#allocation5 + $0x47c] sm:$0xf]
    %v462 = vld [vmem:[#allocation5 + $0x480] sm:$0xf]
    %v463 = vld [vmem:[#allocation5 + $0x484] sm:$0xf]
    %v464 = vld [vmem:[#allocation5 + $0x488] sm:$0xf]
    %v465 = vld [vmem:[#allocation5 + $0x48c] sm:$0xf]
    %v466 = vld [vmem:[#allocation5 + $0x490] sm:$0xf]
    %v467 = vld [vmem:[#allocation5 + $0x494] sm:$0xf]
    %v468 = vld [vmem:[#allocation5 + $0x498] sm:$0xf]
    %v469 = vld [vmem:[#allocation5 + $0x49c] sm:$0xf]
    %v470 = vld [vmem:[#allocation5 + $0x4a0] sm:$0xf]
    %v471 = vld [vmem:[#allocation5 + $0x4a4] sm:$0xf]
    %v472 = vld [vmem:[#allocation5 + $0x4a8] sm:$0xf]
    %v473 = vld [vmem:[#allocation5 + $0x4ac] sm:$0xf]
    %v474 = vld [vmem:[#allocation5 + $0x4b0] sm:$0xf]
    %v475 = vld [vmem:[#allocation5 + $0x4b4] sm:$0xf]
    %v476 = vld [vmem:[#allocation5 + $0x4b8] sm:$0xf]
    %v477 = vld [vmem:[#allocation5 + $0x4bc] sm:$0xf]
    %v478 = vld [vmem:[#allocation5 + $0x4c0] sm:$0xf]
    %v479 = vld [vmem:[#allocation5 + $0x4c4] sm:$0xf]
    %v480 = vld [vmem:[#allocation5 + $0x4c8] sm:$0xf]
    %v481 = vld [vmem:[#allocation5 + $0x4cc] sm:$0xf]
    %v482 = vld [vmem:[#allocation5 + $0x4d0] sm:$0xf]
    %v483 = vld [vmem:[#allocation5 + $0x4d4] sm:$0xf]
    %v484 = vld [vmem:[#allocation5 + $0x4d8] sm:$0xf]
    %v485 = vld [vmem:[#allocation5 + $0x4dc] sm:$0xf]
    %v486 = vld [vmem:[#allocation5 + $0x4e0] sm:$0xf]
    %v487 = vld [vmem:[#allocation5 + $0x4e4] sm:$0xf]
    %v488 = vld [vmem:[#allocation5 + $0x4e8] sm:$0xf]
    %v489 = vld [vmem:[#allocation5 + $0x4ec] sm:$0xf]
    %v490 = vld [vmem:[#allocation5 + $0x4f0] sm:$0xf]
    %v491 = vld [vmem:[#allocation5 + $0x4f4] sm:$0xf]
    %v492 = vld [vmem:[#allocation5 + $0x4f8] sm:$0xf]
    %v493 = vld [vmem:[#allocation5 + $0x4fc] sm:$0xf]
    %v494 = vld [vmem:[#allocation5 + $0x500] sm:$0xf]
    %v495 = vld [vmem:[#allocation5 + $0x504] sm:$0xf]
    %v496 = vld [vmem:[#allocation5 + $0x508] sm:$0xf]
    %v497 = vld [vmem:[#allocation5 + $0x50c] sm:$0xf]
    %v498 = vld [vmem:[#allocation5 + $0x510] sm:$0xf]
    %v499 = vld [vmem:[#allocation5 + $0x514] sm:$0xf]
    %v500 = vld [vmem:[#allocation5 + $0x518] sm:$0xf]
    %v501 = vld [vmem:[#allocation5 + $0x51c] sm:$0xf]
    %v502 = vld [vmem:[#allocation5 + $0x520] sm:$0xf]
    %v503 = vld [vmem:[#allocation5 + $0x524] sm:$0xf]
    %v504 = vld [vmem:[#allocation5 + $0x528] sm:$0xf]
    %v505 = vld [vmem:[#allocation5 + $0x52c] sm:$0xf]
    %v506 = vld [vmem:[#allocation5 + $0x530] sm:$0xf]
    %v507 = vld [vmem:[#allocation5 + $0x534] sm:$0xf]
    %v508 = vld [vmem:[#allocation5 + $0x538] sm:$0xf]
    %v509 = vld [vmem:[#allocation5 + $0x53c] sm:$0xf]
    %v510 = vld [vmem:[#allocation5 + $0x540] sm:$0xf]
    %v511 = vld [vmem:[#allocation5 + $0x544] sm:$0xf]
    %v512 = vld [vmem:[#allocation5 + $0x548] sm:$0xf]
    %v513 = vld [vmem:[#allocation5 + $0x54c] sm:$0xf]
    %v514 = vld [vmem:[#allocation5 + $0x550] sm:$0xf]
    %v515 = vld [vmem:[#allocation5 + $0x554] sm:$0xf]
    %v516 = vld [vmem:[#allocation5 + $0x558] sm:$0xf]
    %v517 = vld [vmem:[#allocation5 + $0x55c] sm:$0xf]
    %v518 = vld [vmem:[#allocation5 + $0x560] sm:$0xf]
    %v519 = vld [vmem:[#allocation5 + $0x564] sm:$0xf]
    %v520 = vld [vmem:[#allocation5 + $0x568] sm:$0xf]
    %v521 = vld [vmem:[#allocation5 + $0x56c] sm:$0xf]
    %v522 = vld [vmem:[#allocation5 + $0x570] sm:$0xf]
    %v523 = vld [vmem:[#allocation5 + $0x574] sm:$0xf]
    %v524 = vld [vmem:[#allocation5 + $0x578] sm:$0xf]
    %v525 = vld [vmem:[#allocation5 + $0x57c] sm:$0xf]
    %v526 = vld [vmem:[#allocation5 + $0x580] sm:$0xf]
    %v527 = vld [vmem:[#allocation5 + $0x584] sm:$0xf]
    %v528 = vld [vmem:[#allocation5 + $0x588] sm:$0xf]
    %v529 = vld [vmem:[#allocation5 + $0x58c] sm:$0xf]
    %v530 = vld [vmem:[#allocation5 + $0x590] sm:$0xf]
    %v531 = vld [vmem:[#allocation5 + $0x594] sm:$0xf]
    %v532 = vld [vmem:[#allocation5 + $0x598] sm:$0xf]
    %v533 = vld [vmem:[#allocation5 + $0x59c] sm:$0xf]
    %v534 = vld [vmem:[#allocation5 + $0x5a0] sm:$0xf]
    %v535 = vld [vmem:[#allocation5 + $0x5a4] sm:$0xf]
    %v536 = vld [vmem:[#allocation5 + $0x5a8] sm:$0xf]
    %v537 = vld [vmem:[#allocation5 + $0x5ac] sm:$0xf]
    %v538 = vld [vmem:[#allocation5 + $0x5b0] sm:$0xf]
    %v539 = vld [vmem:[#allocation5 + $0x5b4] sm:$0xf]
    %v540 = vld [vmem:[#allocation5 + $0x5b8] sm:$0xf]
    %v541 = vld [vmem:[#allocation5 + $0x5bc] sm:$0xf]
    %v542 = vld [vmem:[#allocation5 + $0x5c0] sm:$0xf]
    %v543 = vld [vmem:[#allocation5 + $0x5c4] sm:$0xf]
    %v544 = vld [vmem:[#allocation5 + $0x5c8] sm:$0xf]
    %v545 = vld [vmem:[#allocation5 + $0x5cc] sm:$0xf]
    %v546 = vld [vmem:[#allocation5 + $0x5d0] sm:$0xf]
    %v547 = vld [vmem:[#allocation5 + $0x5d4] sm:$0xf]
    %v548 = vld [vmem:[#allocation5 + $0x5d8] sm:$0xf]
    %v549 = vld [vmem:[#allocation5 + $0x5dc] sm:$0xf]
    %v550 = vld [vmem:[#allocation5 + $0x5e0] sm:$0xf]
    %v551 = vld [vmem:[#allocation5 + $0x5e4] sm:$0xf]
    %v552 = vld [vmem:[#allocation5 + $0x5e8] sm:$0xf]
    %v553 = vld [vmem:[#allocation5 + $0x5ec] sm:$0xf]
    %v554 = vld [vmem:[#allocation5 + $0x5f0] sm:$0xf]
    %v555 = vld [vmem:[#allocation5 + $0x5f4] sm:$0xf]
    %v556 = vld [vmem:[#allocation5 + $0x5f8] sm:$0xf]
    %v557 = vld [vmem:[#allocation5 + $0x5fc] sm:$0xf]
    %v558 = vld [vmem:[%s2] sm:$0x1]
    %v560 = vlaneseq
    %v561 = vshrl.u32 %v560, 7
    %v562 = vsub.s32 0, %v561
    %v563 = vrot.slane %v558, %v562
    %v949 = vunpack.c.l.b16 %v174
    %v950 = vunpack.c.l.b16 %v175
    %v951 = vunpack.c.l.b16 %v176
    %v952 = vunpack.c.l.b16 %v177
    %v953 = vunpack.c.l.b16 %v178
    %v954 = vunpack.c.l.b16 %v179
    %v955 = vunpack.c.l.b16 %v180
    %v956 = vunpack.c.l.b16 %v181
    %v957 = vunpack.c.l.b16 %v182
    %v958 = vunpack.c.l.b16 %v183
    %v959 = vunpack.c.l.b16 %v184
    %v960 = vunpack.c.l.b16 %v185
    %v961 = vunpack.c.l.b16 %v186
    %v962 = vunpack.c.l.b16 %v187
    %v963 = vunpack.c.l.b16 %v188
    %v964 = vunpack.c.l.b16 %v189
    %v965 = vunpack.c.l.b16 %v190
    %v966 = vunpack.c.l.b16 %v191
    %v967 = vunpack.c.l.b16 %v192
    %v968 = vunpack.c.l.b16 %v193
    %v969 = vunpack.c.l.b16 %v194
    %v970 = vunpack.c.l.b16 %v195
    %v971 = vunpack.c.l.b16 %v196
    %v972 = vunpack.c.l.b16 %v197
    %v973 = vunpack.c.l.b16 %v198
    %v974 = vunpack.c.l.b16 %v199
    %v975 = vunpack.c.l.b16 %v200
    %v976 = vunpack.c.l.b16 %v201
    %v977 = vunpack.c.l.b16 %v202
    %v978 = vunpack.c.l.b16 %v203
    %v979 = vunpack.c.l.b16 %v204
    %v980 = vunpack.c.l.b16 %v205
    %v981 = vunpack.c.l.b16 %v206
    %v982 = vunpack.c.l.b16 %v207
    %v983 = vunpack.c.l.b16 %v208
    %v984 = vunpack.c.l.b16 %v209
    %v985 = vunpack.c.l.b16 %v210
    %v986 = vunpack.c.l.b16 %v211
    %v987 = vunpack.c.l.b16 %v212
    %v988 = vunpack.c.l.b16 %v213
    %v989 = vunpack.c.l.b16 %v214
    %v990 = vunpack.c.l.b16 %v215
    %v991 = vunpack.c.l.b16 %v216
    %v992 = vunpack.c.l.b16 %v217
    %v993 = vunpack.c.l.b16 %v218
    %v994 = vunpack.c.l.b16 %v219
    %v995 = vunpack.c.l.b16 %v220
    %v996 = vunpack.c.l.b16 %v221
    %v997 = vunpack.c.l.b16 %v222
    %v998 = vunpack.c.l.b16 %v223
    %v999 = vunpack.c.l.b16 %v224
    %v1000 = vunpack.c.l.b16 %v225
    %v1001 = vunpack.c.l.b16 %v226
    %v1002 = vunpack.c.l.b16 %v227
    %v1003 = vunpack.c.l.b16 %v228
    %v1004 = vunpack.c.l.b16 %v229
    %v1005 = vunpack.c.l.b16 %v230
    %v1006 = vunpack.c.l.b16 %v231
    %v1007 = vunpack.c.l.b16 %v232
    %v1008 = vunpack.c.l.b16 %v233
    %v1009 = vunpack.c.l.b16 %v234
    %v1010 = vunpack.c.l.b16 %v235
    %v1011 = vunpack.c.l.b16 %v236
    %v1012 = vunpack.c.l.b16 %v237
    %v1013 = vunpack.c.l.b16 %v238
    %v1014 = vunpack.c.l.b16 %v239
    %v1015 = vunpack.c.l.b16 %v240
    %v1016 = vunpack.c.l.b16 %v241
    %v1017 = vunpack.c.l.b16 %v242
    %v1018 = vunpack.c.l.b16 %v243
    %v1019 = vunpack.c.l.b16 %v244
    %v1020 = vunpack.c.l.b16 %v245
    %v1021 = vunpack.c.l.b16 %v246
    %v1022 = vunpack.c.l.b16 %v247
    %v1023 = vunpack.c.l.b16 %v248
    %v1024 = vunpack.c.l.b16 %v249
    %v1025 = vunpack.c.l.b16 %v250
    %v1026 = vunpack.c.l.b16 %v251
    %v1027 = vunpack.c.l.b16 %v252
    %v1028 = vunpack.c.l.b16 %v253
    %v1029 = vunpack.c.l.b16 %v254
    %v1030 = vunpack.c.l.b16 %v255
    %v1031 = vunpack.c.l.b16 %v256
    %v1032 = vunpack.c.l.b16 %v257
    %v1033 = vunpack.c.l.b16 %v258
    %v1034 = vunpack.c.l.b16 %v259
    %v1035 = vunpack.c.l.b16 %v260
    %v1036 = vunpack.c.l.b16 %v261
    %v1037 = vunpack.c.l.b16 %v262
    %v1038 = vunpack.c.l.b16 %v263
    %v1039 = vunpack.c.l.b16 %v264
    %v1040 = vunpack.c.l.b16 %v265
    %v1041 = vunpack.c.l.b16 %v266
    %v1042 = vunpack.c.l.b16 %v267
    %v1043 = vunpack.c.l.b16 %v268
    %v1044 = vunpack.c.l.b16 %v269
    %v1045 = vunpack.c.l.b16 %v270
    %v1046 = vunpack.c.l.b16 %v271
    %v1047 = vunpack.c.l.b16 %v272
    %v1048 = vunpack.c.l.b16 %v273
    %v1049 = vunpack.c.l.b16 %v274
    %v1050 = vunpack.c.l.b16 %v275
    %v1051 = vunpack.c.l.b16 %v276
    %v1052 = vunpack.c.l.b16 %v277
    %v1053 = vunpack.c.l.b16 %v278
    %v1054 = vunpack.c.l.b16 %v279
    %v1055 = vunpack.c.l.b16 %v280
    %v1056 = vunpack.c.l.b16 %v281
    %v1057 = vunpack.c.l.b16 %v282
    %v1058 = vunpack.c.l.b16 %v283
    %v1059 = vunpack.c.l.b16 %v284
    %v1060 = vunpack.c.l.b16 %v285
    %v1061 = vunpack.c.l.b16 %v286
    %v1062 = vunpack.c.l.b16 %v287
    %v1063 = vunpack.c.l.b16 %v288
    %v1064 = vunpack.c.l.b16 %v289
    %v1065 = vunpack.c.l.b16 %v290
    %v1066 = vunpack.c.l.b16 %v291
    %v1067 = vunpack.c.l.b16 %v292
    %v1068 = vunpack.c.l.b16 %v293
    %v1069 = vunpack.c.l.b16 %v294
    %v1070 = vunpack.c.l.b16 %v295
    %v1071 = vunpack.c.l.b16 %v296
    %v1072 = vunpack.c.l.b16 %v297
    %v1073 = vunpack.c.l.b16 %v298
    %v1074 = vunpack.c.l.b16 %v299
    %v1075 = vunpack.c.l.b16 %v300
    %v1076 = vunpack.c.l.b16 %v301
    %v1077 = vunpack.c.l.b16 %v302
    %v1078 = vunpack.c.l.b16 %v303
    %v1079 = vunpack.c.l.b16 %v304
    %v1080 = vunpack.c.l.b16 %v305
    %v1081 = vunpack.c.l.b16 %v306
    %v1082 = vunpack.c.l.b16 %v307
    %v1083 = vunpack.c.l.b16 %v308
    %v1084 = vunpack.c.l.b16 %v309
    %v1085 = vunpack.c.l.b16 %v310
    %v1086 = vunpack.c.l.b16 %v311
    %v1087 = vunpack.c.l.b16 %v312
    %v1088 = vunpack.c.l.b16 %v313
    %v1089 = vunpack.c.l.b16 %v314
    %v1090 = vunpack.c.l.b16 %v315
    %v1091 = vunpack.c.l.b16 %v316
    %v1092 = vunpack.c.l.b16 %v317
    %v1093 = vunpack.c.l.b16 %v318
    %v1094 = vunpack.c.l.b16 %v319
    %v1095 = vunpack.c.l.b16 %v320
    %v1096 = vunpack.c.l.b16 %v321
    %v1097 = vunpack.c.l.b16 %v322
    %v1098 = vunpack.c.l.b16 %v323
    %v1099 = vunpack.c.l.b16 %v324
    %v1100 = vunpack.c.l.b16 %v325
    %v1101 = vunpack.c.l.b16 %v326
    %v1102 = vunpack.c.l.b16 %v327
    %v1103 = vunpack.c.l.b16 %v328
    %v1104 = vunpack.c.l.b16 %v329
    %v1105 = vunpack.c.l.b16 %v330
    %v1106 = vunpack.c.l.b16 %v331
    %v1107 = vunpack.c.l.b16 %v332
    %v1108 = vunpack.c.l.b16 %v333
    %v1109 = vunpack.c.l.b16 %v334
    %v1110 = vunpack.c.l.b16 %v335
    %v1111 = vunpack.c.l.b16 %v336
    %v1112 = vunpack.c.l.b16 %v337
    %v1113 = vunpack.c.l.b16 %v338
    %v1114 = vunpack.c.l.b16 %v339
    %v1115 = vunpack.c.l.b16 %v340
    %v1116 = vunpack.c.l.b16 %v341
    %v1117 = vunpack.c.l.b16 %v342
    %v1118 = vunpack.c.l.b16 %v343
    %v1119 = vunpack.c.l.b16 %v344
    %v1120 = vunpack.c.l.b16 %v345
    %v1121 = vunpack.c.l.b16 %v346
    %v1122 = vunpack.c.l.b16 %v347
    %v1123 = vunpack.c.l.b16 %v348
    %v1124 = vunpack.c.l.b16 %v349
    %v1125 = vunpack.c.l.b16 %v350
    %v1126 = vunpack.c.l.b16 %v351
    %v1127 = vunpack.c.l.b16 %v352
    %v1128 = vunpack.c.l.b16 %v353
    %v1129 = vunpack.c.l.b16 %v354
    %v1130 = vunpack.c.l.b16 %v355
    %v1131 = vunpack.c.l.b16 %v356
    %v1132 = vunpack.c.l.b16 %v357
    %v1133 = vunpack.c.l.b16 %v358
    %v1134 = vunpack.c.l.b16 %v359
    %v1135 = vunpack.c.l.b16 %v360
    %v1136 = vunpack.c.l.b16 %v361
    %v1137 = vunpack.c.l.b16 %v362
    %v1138 = vunpack.c.l.b16 %v363
    %v1139 = vunpack.c.l.b16 %v364
    %v1140 = vunpack.c.l.b16 %v365
    %v1141 = vunpack.c.l.b16 %v366
    %v1142 = vunpack.c.l.b16 %v367
    %v1143 = vunpack.c.l.b16 %v368
    %v1144 = vunpack.c.l.b16 %v369
    %v1145 = vunpack.c.l.b16 %v370
    %v1146 = vunpack.c.l.b16 %v371
    %v1147 = vunpack.c.l.b16 %v372
    %v1148 = vunpack.c.l.b16 %v373
    %v1149 = vunpack.c.l.b16 %v374
    %v1150 = vunpack.c.l.b16 %v375
    %v1151 = vunpack.c.l.b16 %v376
    %v1152 = vunpack.c.l.b16 %v377
    %v1153 = vunpack.c.l.b16 %v378
    %v1154 = vunpack.c.l.b16 %v379
    %v1155 = vunpack.c.l.b16 %v380
    %v1156 = vunpack.c.l.b16 %v381
    %v1157 = vunpack.c.l.b16 %v382
    %v1158 = vunpack.c.l.b16 %v383
    %v1159 = vunpack.c.l.b16 %v384
    %v1160 = vunpack.c.l.b16 %v385
    %v1161 = vunpack.c.l.b16 %v386
    %v1162 = vunpack.c.l.b16 %v387
    %v1163 = vunpack.c.l.b16 %v388
    %v1164 = vunpack.c.l.b16 %v389
    %v1165 = vunpack.c.l.b16 %v390
    %v1166 = vunpack.c.l.b16 %v391
    %v1167 = vunpack.c.l.b16 %v392
    %v1168 = vunpack.c.l.b16 %v393
    %v1169 = vunpack.c.l.b16 %v394
    %v1170 = vunpack.c.l.b16 %v395
    %v1171 = vunpack.c.l.b16 %v396
    %v1172 = vunpack.c.l.b16 %v397
    %v1173 = vunpack.c.l.b16 %v398
    %v1174 = vunpack.c.l.b16 %v399
    %v1175 = vunpack.c.l.b16 %v400
    %v1176 = vunpack.c.l.b16 %v401
    %v1177 = vunpack.c.l.b16 %v402
    %v1178 = vunpack.c.l.b16 %v403
    %v1179 = vunpack.c.l.b16 %v404
    %v1180 = vunpack.c.l.b16 %v405
    %v1181 = vunpack.c.l.b16 %v406
    %v1182 = vunpack.c.l.b16 %v407
    %v1183 = vunpack.c.l.b16 %v408
    %v1184 = vunpack.c.l.b16 %v409
    %v1185 = vunpack.c.l.b16 %v410
    %v1186 = vunpack.c.l.b16 %v411
    %v1187 = vunpack.c.l.b16 %v412
    %v1188 = vunpack.c.l.b16 %v413
    %v1189 = vunpack.c.l.b16 %v414
    %v1190 = vunpack.c.l.b16 %v415
    %v1191 = vunpack.c.l.b16 %v416
    %v1192 = vunpack.c.l.b16 %v417
    %v1193 = vunpack.c.l.b16 %v418
    %v1194 = vunpack.c.l.b16 %v419
    %v1195 = vunpack.c.l.b16 %v420
    %v1196 = vunpack.c.l.b16 %v421
    %v1197 = vunpack.c.l.b16 %v422
    %v1198 = vunpack.c.l.b16 %v423
    %v1199 = vunpack.c.l.b16 %v424
    %v1200 = vunpack.c.l.b16 %v425
    %v1201 = vunpack.c.l.b16 %v426
    %v1202 = vunpack.c.l.b16 %v427
    %v1203 = vunpack.c.l.b16 %v428
    %v1204 = vunpack.c.l.b16 %v429
    %v1205 = vunpack.c.l.b16 %v430
    %v1206 = vunpack.c.l.b16 %v431
    %v1207 = vunpack.c.l.b16 %v432
    %v1208 = vunpack.c.l.b16 %v433
    %v1209 = vunpack.c.l.b16 %v434
    %v1210 = vunpack.c.l.b16 %v435
    %v1211 = vunpack.c.l.b16 %v436
    %v1212 = vunpack.c.l.b16 %v437
    %v1213 = vunpack.c.l.b16 %v438
    %v1214 = vunpack.c.l.b16 %v439
    %v1215 = vunpack.c.l.b16 %v440
    %v1216 = vunpack.c.l.b16 %v441
    %v1217 = vunpack.c.l.b16 %v442
    %v1218 = vunpack.c.l.b16 %v443
    %v1219 = vunpack.c.l.b16 %v444
    %v1220 = vunpack.c.l.b16 %v445
    %v1221 = vunpack.c.l.b16 %v446
    %v1222 = vunpack.c.l.b16 %v447
    %v1223 = vunpack.c.l.b16 %v448
    %v1224 = vunpack.c.l.b16 %v449
    %v1225 = vunpack.c.l.b16 %v450
    %v1226 = vunpack.c.l.b16 %v451
    %v1227 = vunpack.c.l.b16 %v452
    %v1228 = vunpack.c.l.b16 %v453
    %v1229 = vunpack.c.l.b16 %v454
    %v1230 = vunpack.c.l.b16 %v455
    %v1231 = vunpack.c.l.b16 %v456
    %v1232 = vunpack.c.l.b16 %v457
    %v1233 = vunpack.c.l.b16 %v458
    %v1234 = vunpack.c.l.b16 %v459
    %v1235 = vunpack.c.l.b16 %v460
    %v1236 = vunpack.c.l.b16 %v461
    %v1237 = vunpack.c.l.b16 %v462
    %v1238 = vunpack.c.l.b16 %v463
    %v1239 = vunpack.c.l.b16 %v464
    %v1240 = vunpack.c.l.b16 %v465
    %v1241 = vunpack.c.l.b16 %v466
    %v1242 = vunpack.c.l.b16 %v467
    %v1243 = vunpack.c.l.b16 %v468
    %v1244 = vunpack.c.l.b16 %v469
    %v1245 = vunpack.c.l.b16 %v470
    %v1246 = vunpack.c.l.b16 %v471
    %v1247 = vunpack.c.l.b16 %v472
    %v1248 = vunpack.c.l.b16 %v473
    %v1249 = vunpack.c.l.b16 %v474
    %v1250 = vunpack.c.l.b16 %v475
    %v1251 = vunpack.c.l.b16 %v476
    %v1252 = vunpack.c.l.b16 %v477
    %v1253 = vunpack.c.l.b16 %v478
    %v1254 = vunpack.c.l.b16 %v479
    %v1255 = vunpack.c.l.b16 %v480
    %v1256 = vunpack.c.l.b16 %v481
    %v1257 = vunpack.c.l.b16 %v482
    %v1258 = vunpack.c.l.b16 %v483
    %v1259 = vunpack.c.l.b16 %v484
    %v1260 = vunpack.c.l.b16 %v485
    %v1261 = vunpack.c.l.b16 %v486
    %v1262 = vunpack.c.l.b16 %v487
    %v1263 = vunpack.c.l.b16 %v488
    %v1264 = vunpack.c.l.b16 %v489
    %v1265 = vunpack.c.l.b16 %v490
    %v1266 = vunpack.c.l.b16 %v491
    %v1267 = vunpack.c.l.b16 %v492
    %v1268 = vunpack.c.l.b16 %v493
    %v1269 = vunpack.c.l.b16 %v494
    %v1270 = vunpack.c.l.b16 %v495
    %v1271 = vunpack.c.l.b16 %v496
    %v1272 = vunpack.c.l.b16 %v497
    %v1273 = vunpack.c.l.b16 %v498
    %v1274 = vunpack.c.l.b16 %v499
    %v1275 = vunpack.c.l.b16 %v500
    %v1276 = vunpack.c.l.b16 %v501
    %v1277 = vunpack.c.l.b16 %v502
    %v1278 = vunpack.c.l.b16 %v503
    %v1279 = vunpack.c.l.b16 %v504
    %v1280 = vunpack.c.l.b16 %v505
    %v1281 = vunpack.c.l.b16 %v506
    %v1282 = vunpack.c.l.b16 %v507
    %v1283 = vunpack.c.l.b16 %v508
    %v1284 = vunpack.c.l.b16 %v509
    %v1285 = vunpack.c.l.b16 %v510
    %v1286 = vunpack.c.l.b16 %v511
    %v1287 = vunpack.c.l.b16 %v512
    %v1288 = vunpack.c.l.b16 %v513
    %v1289 = vunpack.c.l.b16 %v514
    %v1290 = vunpack.c.l.b16 %v515
    %v1291 = vunpack.c.l.b16 %v516
    %v1292 = vunpack.c.l.b16 %v517
    %v1293 = vunpack.c.l.b16 %v518
    %v1294 = vunpack.c.l.b16 %v519
    %v1295 = vunpack.c.l.b16 %v520
    %v1296 = vunpack.c.l.b16 %v521
    %v1297 = vunpack.c.l.b16 %v522
    %v1298 = vunpack.c.l.b16 %v523
    %v1299 = vunpack.c.l.b16 %v524
    %v1300 = vunpack.c.l.b16 %v525
    %v1301 = vunpack.c.l.b16 %v526
    %v1302 = vunpack.c.l.b16 %v527
    %v1303 = vunpack.c.l.b16 %v528
    %v1304 = vunpack.c.l.b16 %v529
    %v1305 = vunpack.c.l.b16 %v530
    %v1306 = vunpack.c.l.b16 %v531
    %v1307 = vunpack.c.l.b16 %v532
    %v1308 = vunpack.c.l.b16 %v533
    %v1309 = vunpack.c.l.b16 %v534
    %v1310 = vunpack.c.l.b16 %v535
    %v1311 = vunpack.c.l.b16 %v536
    %v1312 = vunpack.c.l.b16 %v537
    %v1313 = vunpack.c.l.b16 %v538
    %v1314 = vunpack.c.l.b16 %v539
    %v1315 = vunpack.c.l.b16 %v540
    %v1316 = vunpack.c.l.b16 %v541
    %v1317 = vunpack.c.l.b16 %v542
    %v1318 = vunpack.c.l.b16 %v543
    %v1319 = vunpack.c.l.b16 %v544
    %v1320 = vunpack.c.l.b16 %v545
    %v1321 = vunpack.c.l.b16 %v546
    %v1322 = vunpack.c.l.b16 %v547
    %v1323 = vunpack.c.l.b16 %v548
    %v1324 = vunpack.c.l.b16 %v549
    %v1325 = vunpack.c.l.b16 %v550
    %v1326 = vunpack.c.l.b16 %v551
    %v1327 = vunpack.c.l.b16 %v552
    %v1328 = vunpack.c.l.b16 %v553
    %v1329 = vunpack.c.l.b16 %v554
    %v1330 = vunpack.c.l.b16 %v555
    %v1331 = vunpack.c.l.b16 %v556
    %v1332 = vunpack.c.l.b16 %v557
    %v1333 = vpack.c.b16 %v950, %v949
    %v1334 = vpack.c.b16 %v952, %v951
    %v1335 = vpack.c.b16 %v954, %v953
    %v1336 = vpack.c.b16 %v956, %v955
    %v1337 = vpack.c.b16 %v958, %v957
    %v1338 = vpack.c.b16 %v960, %v959
    %v1339 = vpack.c.b16 %v962, %v961
    %v1340 = vpack.c.b16 %v964, %v963
    %v1341 = vpack.c.b16 %v966, %v965
    %v1342 = vpack.c.b16 %v968, %v967
    %v1343 = vpack.c.b16 %v970, %v969
    %v1344 = vpack.c.b16 %v972, %v971
    %v1345 = vpack.c.b16 %v974, %v973
    %v1346 = vpack.c.b16 %v976, %v975
    %v1347 = vpack.c.b16 %v978, %v977
    %v1348 = vpack.c.b16 %v980, %v979
    %v1349 = vpack.c.b16 %v982, %v981
    %v1350 = vpack.c.b16 %v984, %v983
    %v1351 = vpack.c.b16 %v986, %v985
    %v1352 = vpack.c.b16 %v988, %v987
    %v1353 = vpack.c.b16 %v990, %v989
    %v1354 = vpack.c.b16 %v992, %v991
    %v1355 = vpack.c.b16 %v994, %v993
    %v1356 = vpack.c.b16 %v996, %v995
    %v1357 = vpack.c.b16 %v998, %v997
    %v1358 = vpack.c.b16 %v1000, %v999
    %v1359 = vpack.c.b16 %v1002, %v1001
    %v1360 = vpack.c.b16 %v1004, %v1003
    %v1361 = vpack.c.b16 %v1006, %v1005
    %v1362 = vpack.c.b16 %v1008, %v1007
    %v1363 = vpack.c.b16 %v1010, %v1009
    %v1364 = vpack.c.b16 %v1012, %v1011
    %v1365 = vpack.c.b16 %v1014, %v1013
    %v1366 = vpack.c.b16 %v1016, %v1015
    %v1367 = vpack.c.b16 %v1018, %v1017
    %v1368 = vpack.c.b16 %v1020, %v1019
    %v1369 = vpack.c.b16 %v1022, %v1021
    %v1370 = vpack.c.b16 %v1024, %v1023
    %v1371 = vpack.c.b16 %v1026, %v1025
    %v1372 = vpack.c.b16 %v1028, %v1027
    %v1373 = vpack.c.b16 %v1030, %v1029
    %v1374 = vpack.c.b16 %v1032, %v1031
    %v1375 = vpack.c.b16 %v1034, %v1033
    %v1376 = vpack.c.b16 %v1036, %v1035
    %v1377 = vpack.c.b16 %v1038, %v1037
    %v1378 = vpack.c.b16 %v1040, %v1039
    %v1379 = vpack.c.b16 %v1042, %v1041
    %v1380 = vpack.c.b16 %v1044, %v1043
    %v1381 = vpack.c.b16 %v1046, %v1045
    %v1382 = vpack.c.b16 %v1048, %v1047
    %v1383 = vpack.c.b16 %v1050, %v1049
    %v1384 = vpack.c.b16 %v1052, %v1051
    %v1385 = vpack.c.b16 %v1054, %v1053
    %v1386 = vpack.c.b16 %v1056, %v1055
    %v1387 = vpack.c.b16 %v1058, %v1057
    %v1388 = vpack.c.b16 %v1060, %v1059
    %v1389 = vpack.c.b16 %v1062, %v1061
    %v1390 = vpack.c.b16 %v1064, %v1063
    %v1391 = vpack.c.b16 %v1066, %v1065
    %v1392 = vpack.c.b16 %v1068, %v1067
    %v1393 = vpack.c.b16 %v1070, %v1069
    %v1394 = vpack.c.b16 %v1072, %v1071
    %v1395 = vpack.c.b16 %v1074, %v1073
    %v1396 = vpack.c.b16 %v1076, %v1075
    %v1397 = vpack.c.b16 %v1078, %v1077
    %v1398 = vpack.c.b16 %v1080, %v1079
    %v1399 = vpack.c.b16 %v1082, %v1081
    %v1400 = vpack.c.b16 %v1084, %v1083
    %v1401 = vpack.c.b16 %v1086, %v1085
    %v1402 = vpack.c.b16 %v1088, %v1087
    %v1403 = vpack.c.b16 %v1090, %v1089
    %v1404 = vpack.c.b16 %v1092, %v1091
    %v1405 = vpack.c.b16 %v1094, %v1093
    %v1406 = vpack.c.b16 %v1096, %v1095
    %v1407 = vpack.c.b16 %v1098, %v1097
    %v1408 = vpack.c.b16 %v1100, %v1099
    %v1409 = vpack.c.b16 %v1102, %v1101
    %v1410 = vpack.c.b16 %v1104, %v1103
    %v1411 = vpack.c.b16 %v1106, %v1105
    %v1412 = vpack.c.b16 %v1108, %v1107
    %v1413 = vpack.c.b16 %v1110, %v1109
    %v1414 = vpack.c.b16 %v1112, %v1111
    %v1415 = vpack.c.b16 %v1114, %v1113
    %v1416 = vpack.c.b16 %v1116, %v1115
    %v1417 = vpack.c.b16 %v1118, %v1117
    %v1418 = vpack.c.b16 %v1120, %v1119
    %v1419 = vpack.c.b16 %v1122, %v1121
    %v1420 = vpack.c.b16 %v1124, %v1123
    %v1421 = vpack.c.b16 %v1126, %v1125
    %v1422 = vpack.c.b16 %v1128, %v1127
    %v1423 = vpack.c.b16 %v1130, %v1129
    %v1424 = vpack.c.b16 %v1132, %v1131
    %v1425 = vpack.c.b16 %v1134, %v1133
    %v1426 = vpack.c.b16 %v1136, %v1135
    %v1427 = vpack.c.b16 %v1138, %v1137
    %v1428 = vpack.c.b16 %v1140, %v1139
    %v1429 = vpack.c.b16 %v1142, %v1141
    %v1430 = vpack.c.b16 %v1144, %v1143
    %v1431 = vpack.c.b16 %v1146, %v1145
    %v1432 = vpack.c.b16 %v1148, %v1147
    %v1433 = vpack.c.b16 %v1150, %v1149
    %v1434 = vpack.c.b16 %v1152, %v1151
    %v1435 = vpack.c.b16 %v1154, %v1153
    %v1436 = vpack.c.b16 %v1156, %v1155
    %v1437 = vpack.c.b16 %v1158, %v1157
    %v1438 = vpack.c.b16 %v1160, %v1159
    %v1439 = vpack.c.b16 %v1162, %v1161
    %v1440 = vpack.c.b16 %v1164, %v1163
    %v1441 = vpack.c.b16 %v1166, %v1165
    %v1442 = vpack.c.b16 %v1168, %v1167
    %v1443 = vpack.c.b16 %v1170, %v1169
    %v1444 = vpack.c.b16 %v1172, %v1171
    %v1445 = vpack.c.b16 %v1174, %v1173
    %v1446 = vpack.c.b16 %v1176, %v1175
    %v1447 = vpack.c.b16 %v1178, %v1177
    %v1448 = vpack.c.b16 %v1180, %v1179
    %v1449 = vpack.c.b16 %v1182, %v1181
    %v1450 = vpack.c.b16 %v1184, %v1183
    %v1451 = vpack.c.b16 %v1186, %v1185
    %v1452 = vpack.c.b16 %v1188, %v1187
    %v1453 = vpack.c.b16 %v1190, %v1189
    %v1454 = vpack.c.b16 %v1192, %v1191
    %v1455 = vpack.c.b16 %v1194, %v1193
    %v1456 = vpack.c.b16 %v1196, %v1195
    %v1457 = vpack.c.b16 %v1198, %v1197
    %v1458 = vpack.c.b16 %v1200, %v1199
    %v1459 = vpack.c.b16 %v1202, %v1201
    %v1460 = vpack.c.b16 %v1204, %v1203
    %v1461 = vpack.c.b16 %v1206, %v1205
    %v1462 = vpack.c.b16 %v1208, %v1207
    %v1463 = vpack.c.b16 %v1210, %v1209
    %v1464 = vpack.c.b16 %v1212, %v1211
    %v1465 = vpack.c.b16 %v1214, %v1213
    %v1466 = vpack.c.b16 %v1216, %v1215
    %v1467 = vpack.c.b16 %v1218, %v1217
    %v1468 = vpack.c.b16 %v1220, %v1219
    %v1469 = vpack.c.b16 %v1222, %v1221
    %v1470 = vpack.c.b16 %v1224, %v1223
    %v1471 = vpack.c.b16 %v1226, %v1225
    %v1472 = vpack.c.b16 %v1228, %v1227
    %v1473 = vpack.c.b16 %v1230, %v1229
    %v1474 = vpack.c.b16 %v1232, %v1231
    %v1475 = vpack.c.b16 %v1234, %v1233
    %v1476 = vpack.c.b16 %v1236, %v1235
    %v1477 = vpack.c.b16 %v1238, %v1237
    %v1478 = vpack.c.b16 %v1240, %v1239
    %v1479 = vpack.c.b16 %v1242, %v1241
    %v1480 = vpack.c.b16 %v1244, %v1243
    %v1481 = vpack.c.b16 %v1246, %v1245
    %v1482 = vpack.c.b16 %v1248, %v1247
    %v1483 = vpack.c.b16 %v1250, %v1249
    %v1484 = vpack.c.b16 %v1252, %v1251
    %v1485 = vpack.c.b16 %v1254, %v1253
    %v1486 = vpack.c.b16 %v1256, %v1255
    %v1487 = vpack.c.b16 %v1258, %v1257
    %v1488 = vpack.c.b16 %v1260, %v1259
    %v1489 = vpack.c.b16 %v1262, %v1261
    %v1490 = vpack.c.b16 %v1264, %v1263
    %v1491 = vpack.c.b16 %v1266, %v1265
    %v1492 = vpack.c.b16 %v1268, %v1267
    %v1493 = vpack.c.b16 %v1270, %v1269
    %v1494 = vpack.c.b16 %v1272, %v1271
    %v1495 = vpack.c.b16 %v1274, %v1273
    %v1496 = vpack.c.b16 %v1276, %v1275
    %v1497 = vpack.c.b16 %v1278, %v1277
    %v1498 = vpack.c.b16 %v1280, %v1279
    %v1499 = vpack.c.b16 %v1282, %v1281
    %v1500 = vpack.c.b16 %v1284, %v1283
    %v1501 = vpack.c.b16 %v1286, %v1285
    %v1502 = vpack.c.b16 %v1288, %v1287
    %v1503 = vpack.c.b16 %v1290, %v1289
    %v1504 = vpack.c.b16 %v1292, %v1291
    %v1505 = vpack.c.b16 %v1294, %v1293
    %v1506 = vpack.c.b16 %v1296, %v1295
    %v1507 = vpack.c.b16 %v1298, %v1297
    %v1508 = vpack.c.b16 %v1300, %v1299
    %v1509 = vpack.c.b16 %v1302, %v1301
    %v1510 = vpack.c.b16 %v1304, %v1303
    %v1511 = vpack.c.b16 %v1306, %v1305
    %v1512 = vpack.c.b16 %v1308, %v1307
    %v1513 = vpack.c.b16 %v1310, %v1309
    %v1514 = vpack.c.b16 %v1312, %v1311
    %v1515 = vpack.c.b16 %v1314, %v1313
    %v1516 = vpack.c.b16 %v1316, %v1315
    %v1517 = vpack.c.b16 %v1318, %v1317
    %v1518 = vpack.c.b16 %v1320, %v1319
    %v1519 = vpack.c.b16 %v1322, %v1321
    %v1520 = vpack.c.b16 %v1324, %v1323
    %v1521 = vpack.c.b16 %v1326, %v1325
    %v1522 = vpack.c.b16 %v1328, %v1327
    %v1523 = vpack.c.b16 %v1330, %v1329
    %v1524 = vpack.c.b16 %v1332, %v1331
    %1717 = vmatprep.subr.bf16.mxu0 0
    %1718 = vmatpush1.bf16.msra.mxu0 %v1333
    %1719 = vmatprep.subr.bf16.mxu0 0
    %1720 = vmatpush1.bf16.msra.mxu0 %v1334
    %1721 = vmatprep.subr.bf16.mxu0 0
    %1722 = vmatpush1.bf16.msra.mxu0 %v1335
    %1723 = vmatprep.subr.bf16.mxu0 0
    %1724 = vmatpush1.bf16.msra.mxu0 %v1336
    %1725 = vmatprep.subr.bf16.mxu0 0
    %1726 = vmatpush1.bf16.msra.mxu0 %v1337
    %1727 = vmatprep.subr.bf16.mxu0 0
    %1728 = vmatpush1.bf16.msra.mxu0 %v1338
    %1729 = vmatprep.subr.bf16.mxu0 0
    %1730 = vmatpush1.bf16.msra.mxu0 %v1339
    %1731 = vmatprep.subr.bf16.mxu0 0
    %1732 = vmatpush1.bf16.msra.mxu0 %v1340
    %1733 = vmatprep.subr.bf16.mxu0 0
    %1734 = vmatpush1.bf16.msra.mxu0 %v1341
    %1735 = vmatprep.subr.bf16.mxu0 0
    %1736 = vmatpush1.bf16.msra.mxu0 %v1342
    %1737 = vmatprep.subr.bf16.mxu0 0
    %1738 = vmatpush1.bf16.msra.mxu0 %v1343
    %1739 = vmatprep.subr.bf16.mxu0 0
    %1740 = vmatpush1.bf16.msra.mxu0 %v1344
    %1741 = vmatprep.subr.bf16.mxu0 0
    %1742 = vmatpush1.bf16.msra.mxu0 %v1345
    %1743 = vmatprep.subr.bf16.mxu0 0
    %1744 = vmatpush1.bf16.msra.mxu0 %v1346
    %1745 = vmatprep.subr.bf16.mxu0 0
    %1746 = vmatpush1.bf16.msra.mxu0 %v1347
    %1747 = vmatprep.subr.bf16.mxu0 0
    %1748 = vmatpush1.bf16.msra.mxu0 %v1348
    %1749 = vmatprep.mubr.bf16.mxu0 %v151
    %1750 = vmatmul.mubr.bf16.gmra.mrb[0].mxu0 %v150
    %v1751 = vpop.f32.mrb[0].mxu0
    %v1752 = vadd.f32 %v563, %v1751
    %v1753 = vpop.f32.mrb[0].mxu0
    %v1754 = vpop.f32.mrb[0].mxu0
    %v1755 = vadd.f32 %v563, %v1754
    %v1756 = vpop.f32.mrb[0].mxu0
    %1757 = vdwg.mxu0
    %1758 = vmatprep.subr.bf16.mxu0 0
    %1759 = vmatpush1.bf16.msra.mxu0 %v1349
    %1760 = vmatprep.subr.bf16.mxu0 0
    %1761 = vmatpush1.bf16.msra.mxu0 %v1350
    %1762 = vmatprep.subr.bf16.mxu0 0
    %1763 = vmatpush1.bf16.msra.mxu0 %v1351
    %1764 = vmatprep.subr.bf16.mxu0 0
    %1765 = vmatpush1.bf16.msra.mxu0 %v1352
    %1766 = vmatprep.subr.bf16.mxu0 0
    %1767 = vmatpush1.bf16.msra.mxu0 %v1353
    %1768 = vmatprep.subr.bf16.mxu0 0
    %1769 = vmatpush1.bf16.msra.mxu0 %v1354
    %1770 = vmatprep.subr.bf16.mxu0 0
    %1771 = vmatpush1.bf16.msra.mxu0 %v1355
    %1772 = vmatprep.subr.bf16.mxu0 0
    %1773 = vmatpush1.bf16.msra.mxu0 %v1356
    %1774 = vmatprep.subr.bf16.mxu0 0
    %1775 = vmatpush1.bf16.msra.mxu0 %v1357
    %1776 = vmatprep.subr.bf16.mxu0 0
    %1777 = vmatpush1.bf16.msra.mxu0 %v1358
    %1778 = vmatprep.subr.bf16.mxu0 0
    %1779 = vmatpush1.bf16.msra.mxu0 %v1359
    %1780 = vmatprep.subr.bf16.mxu0 0
    %1781 = vmatpush1.bf16.msra.mxu0 %v1360
    %1782 = vmatprep.subr.bf16.mxu0 0
    %1783 = vmatpush1.bf16.msra.mxu0 %v1361
    %1784 = vmatprep.subr.bf16.mxu0 0
    %1785 = vmatpush1.bf16.msra.mxu0 %v1362
    %1786 = vmatprep.subr.bf16.mxu0 0
    %1787 = vmatpush1.bf16.msra.mxu0 %v1363
    %1788 = vmatprep.subr.bf16.mxu0 0
    %1789 = vmatpush1.bf16.msra.mxu0 %v1364
    %1790 = vmatprep.mubr.bf16.mxu0 %v153
    %1791 = vmatmul.mubr.bf16.gmra.mrb[0].mxu0 %v152
    %v1792 = vpop.f32.mrb[0].mxu0
    %v1793 = vadd.f32 %v1752, %v1792
    %v1794 = vpop.f32.mrb[0].mxu0
    %v1795 = vpop.f32.mrb[0].mxu0
    %v1796 = vadd.f32 %v1755, %v1795
    %v1797 = vpop.f32.mrb[0].mxu0
    %1798 = vdwg.mxu0
    %1799 = vmatprep.subr.bf16.mxu0 0
    %1800 = vmatpush1.bf16.msra.mxu0 %v1365
    %1801 = vmatprep.subr.bf16.mxu0 0
    %1802 = vmatpush1.bf16.msra.mxu0 %v1366
    %1803 = vmatprep.subr.bf16.mxu0 0
    %1804 = vmatpush1.bf16.msra.mxu0 %v1367
    %1805 = vmatprep.subr.bf16.mxu0 0
    %1806 = vmatpush1.bf16.msra.mxu0 %v1368
    %1807 = vmatprep.subr.bf16.mxu0 0
    %1808 = vmatpush1.bf16.msra.mxu0 %v1369
    %1809 = vmatprep.subr.bf16.mxu0 0
    %1810 = vmatpush1.bf16.msra.mxu0 %v1370
    %1811 = vmatprep.subr.bf16.mxu0 0
    %1812 = vmatpush1.bf16.msra.mxu0 %v1371
    %1813 = vmatprep.subr.bf16.mxu0 0
    %1814 = vmatpush1.bf16.msra.mxu0 %v1372
    %1815 = vmatprep.subr.bf16.mxu0 0
    %1816 = vmatpush1.bf16.msra.mxu0 %v1373
    %1817 = vmatprep.subr.bf16.mxu0 0
    %1818 = vmatpush1.bf16.msra.mxu0 %v1374
    %1819 = vmatprep.subr.bf16.mxu0 0
    %1820 = vmatpush1.bf16.msra.mxu0 %v1375
    %1821 = vmatprep.subr.bf16.mxu0 0
    %1822 = vmatpush1.bf16.msra.mxu0 %v1376
    %1823 = vmatprep.subr.bf16.mxu0 0
    %1824 = vmatpush1.bf16.msra.mxu0 %v1377
    %1825 = vmatprep.subr.bf16.mxu0 0
    %1826 = vmatpush1.bf16.msra.mxu0 %v1378
    %1827 = vmatprep.subr.bf16.mxu0 0
    %1828 = vmatpush1.bf16.msra.mxu0 %v1379
    %1829 = vmatprep.subr.bf16.mxu0 0
    %1830 = vmatpush1.bf16.msra.mxu0 %v1380
    %1831 = vmatprep.mubr.bf16.mxu0 %v155
    %1832 = vmatmul.mubr.bf16.gmra.mrb[0].mxu0 %v154
    %v1833 = vpop.f32.mrb[0].mxu0
    %v1834 = vadd.f32 %v1793, %v1833
    %v1835 = vpop.f32.mrb[0].mxu0
    %v1836 = vpop.f32.mrb[0].mxu0
    %v1837 = vadd.f32 %v1796, %v1836
    %v1838 = vpop.f32.mrb[0].mxu0
    %1839 = vdwg.mxu0
    %1840 = vmatprep.subr.bf16.mxu0 0
    %1841 = vmatpush1.bf16.msra.mxu0 %v1381
    %1842 = vmatprep.subr.bf16.mxu0 0
    %1843 = vmatpush1.bf16.msra.mxu0 %v1382
    %1844 = vmatprep.subr.bf16.mxu0 0
    %1845 = vmatpush1.bf16.msra.mxu0 %v1383
    %1846 = vmatprep.subr.bf16.mxu0 0
    %1847 = vmatpush1.bf16.msra.mxu0 %v1384
    %1848 = vmatprep.subr.bf16.mxu0 0
    %1849 = vmatpush1.bf16.msra.mxu0 %v1385
    %1850 = vmatprep.subr.bf16.mxu0 0
    %1851 = vmatpush1.bf16.msra.mxu0 %v1386
    %1852 = vmatprep.subr.bf16.mxu0 0
    %1853 = vmatpush1.bf16.msra.mxu0 %v1387
    %1854 = vmatprep.subr.bf16.mxu0 0
    %1855 = vmatpush1.bf16.msra.mxu0 %v1388
    %1856 = vmatprep.subr.bf16.mxu0 0
    %1857 = vmatpush1.bf16.msra.mxu0 %v1389
    %1858 = vmatprep.subr.bf16.mxu0 0
    %1859 = vmatpush1.bf16.msra.mxu0 %v1390
    %1860 = vmatprep.subr.bf16.mxu0 0
    %1861 = vmatpush1.bf16.msra.mxu0 %v1391
    %1862 = vmatprep.subr.bf16.mxu0 0
    %1863 = vmatpush1.bf16.msra.mxu0 %v1392
    %1864 = vmatprep.subr.bf16.mxu0 0
    %1865 = vmatpush1.bf16.msra.mxu0 %v1393
    %1866 = vmatprep.subr.bf16.mxu0 0
    %1867 = vmatpush1.bf16.msra.mxu0 %v1394
    %1868 = vmatprep.subr.bf16.mxu0 0
    %1869 = vmatpush1.bf16.msra.mxu0 %v1395
    %1870 = vmatprep.subr.bf16.mxu0 0
    %1871 = vmatpush1.bf16.msra.mxu0 %v1396
    %1872 = vmatprep.mubr.bf16.mxu0 %v157
    %1873 = vmatmul.mubr.bf16.gmra.mrb[0].mxu0 %v156
    %v1874 = vpop.f32.mrb[0].mxu0
    %v1875 = vadd.f32 %v1834, %v1874
    %v1876 = vpop.f32.mrb[0].mxu0
    %v1877 = vpop.f32.mrb[0].mxu0
    %v1878 = vadd.f32 %v1837, %v1877
    %v1879 = vpop.f32.mrb[0].mxu0
    %1880 = vdwg.mxu0
    %1881 = vmatprep.subr.bf16.mxu0 0
    %1882 = vmatpush1.bf16.msra.mxu0 %v1397
    %1883 = vmatprep.subr.bf16.mxu0 0
    %1884 = vmatpush1.bf16.msra.mxu0 %v1398
    %1885 = vmatprep.subr.bf16.mxu0 0
    %1886 = vmatpush1.bf16.msra.mxu0 %v1399
    %1887 = vmatprep.subr.bf16.mxu0 0
    %1888 = vmatpush1.bf16.msra.mxu0 %v1400
    %1889 = vmatprep.subr.bf16.mxu0 0
    %1890 = vmatpush1.bf16.msra.mxu0 %v1401
    %1891 = vmatprep.subr.bf16.mxu0 0
    %1892 = vmatpush1.bf16.msra.mxu0 %v1402
    %1893 = vmatprep.subr.bf16.mxu0 0
    %1894 = vmatpush1.bf16.msra.mxu0 %v1403
    %1895 = vmatprep.subr.bf16.mxu0 0
    %1896 = vmatpush1.bf16.msra.mxu0 %v1404
    %1897 = vmatprep.subr.bf16.mxu0 0
    %1898 = vmatpush1.bf16.msra.mxu0 %v1405
    %1899 = vmatprep.subr.bf16.mxu0 0
    %1900 = vmatpush1.bf16.msra.mxu0 %v1406
    %1901 = vmatprep.subr.bf16.mxu0 0
    %1902 = vmatpush1.bf16.msra.mxu0 %v1407
    %1903 = vmatprep.subr.bf16.mxu0 0
    %1904 = vmatpush1.bf16.msra.mxu0 %v1408
    %1905 = vmatprep.subr.bf16.mxu0 0
    %1906 = vmatpush1.bf16.msra.mxu0 %v1409
    %1907 = vmatprep.subr.bf16.mxu0 0
    %1908 = vmatpush1.bf16.msra.mxu0 %v1410
    %1909 = vmatprep.subr.bf16.mxu0 0
    %1910 = vmatpush1.bf16.msra.mxu0 %v1411
    %1911 = vmatprep.subr.bf16.mxu0 0
    %1912 = vmatpush1.bf16.msra.mxu0 %v1412
    %1913 = vmatprep.mubr.bf16.mxu0 %v159
    %1914 = vmatmul.mubr.bf16.gmra.mrb[0].mxu0 %v158
    %v1915 = vpop.f32.mrb[0].mxu0
    %v1916 = vadd.f32 %v1875, %v1915
    %v1917 = vpop.f32.mrb[0].mxu0
    %v1918 = vpop.f32.mrb[0].mxu0
    %v1919 = vadd.f32 %v1878, %v1918
    %v1920 = vpop.f32.mrb[0].mxu0
    %1921 = vdwg.mxu0
    %1922 = vmatprep.subr.bf16.mxu0 0
    %1923 = vmatpush1.bf16.msra.mxu0 %v1413
    %1924 = vmatprep.subr.bf16.mxu0 0
    %1925 = vmatpush1.bf16.msra.mxu0 %v1414
    %1926 = vmatprep.subr.bf16.mxu0 0
    %1927 = vmatpush1.bf16.msra.mxu0 %v1415
    %1928 = vmatprep.subr.bf16.mxu0 0
    %1929 = vmatpush1.bf16.msra.mxu0 %v1416
    %1930 = vmatprep.subr.bf16.mxu0 0
    %1931 = vmatpush1.bf16.msra.mxu0 %v1417
    %1932 = vmatprep.subr.bf16.mxu0 0
    %1933 = vmatpush1.bf16.msra.mxu0 %v1418
    %1934 = vmatprep.subr.bf16.mxu0 0
    %1935 = vmatpush1.bf16.msra.mxu0 %v1419
    %1936 = vmatprep.subr.bf16.mxu0 0
    %1937 = vmatpush1.bf16.msra.mxu0 %v1420
    %1938 = vmatprep.subr.bf16.mxu0 0
    %1939 = vmatpush1.bf16.msra.mxu0 %v1421
    %1940 = vmatprep.subr.bf16.mxu0 0
    %1941 = vmatpush1.bf16.msra.mxu0 %v1422
    %1942 = vmatprep.subr.bf16.mxu0 0
    %1943 = vmatpush1.bf16.msra.mxu0 %v1423
    %1944 = vmatprep.subr.bf16.mxu0 0
    %1945 = vmatpush1.bf16.msra.mxu0 %v1424
    %1946 = vmatprep.subr.bf16.mxu0 0
    %1947 = vmatpush1.bf16.msra.mxu0 %v1425
    %1948 = vmatprep.subr.bf16.mxu0 0
    %1949 = vmatpush1.bf16.msra.mxu0 %v1426
    %1950 = vmatprep.subr.bf16.mxu0 0
    %1951 = vmatpush1.bf16.msra.mxu0 %v1427
    %1952 = vmatprep.subr.bf16.mxu0 0
    %1953 = vmatpush1.bf16.msra.mxu0 %v1428
    %1954 = vmatprep.mubr.bf16.mxu0 %v161
    %1955 = vmatmul.mubr.bf16.gmra.mrb[0].mxu0 %v160
    %v1956 = vpop.f32.mrb[0].mxu0
    %v1957 = vadd.f32 %v1916, %v1956
    %v1958 = vpop.f32.mrb[0].mxu0
    %v1959 = vpop.f32.mrb[0].mxu0
    %v1960 = vadd.f32 %v1919, %v1959
    %v1961 = vpop.f32.mrb[0].mxu0
    %1962 = vdwg.mxu0
    %1963 = vmatprep.subr.bf16.mxu0 0
    %1964 = vmatpush1.bf16.msra.mxu0 %v1429
    %1965 = vmatprep.subr.bf16.mxu0 0
    %1966 = vmatpush1.bf16.msra.mxu0 %v1430
    %1967 = vmatprep.subr.bf16.mxu0 0
    %1968 = vmatpush1.bf16.msra.mxu0 %v1431
    %1969 = vmatprep.subr.bf16.mxu0 0
    %1970 = vmatpush1.bf16.msra.mxu0 %v1432
    %1971 = vmatprep.subr.bf16.mxu0 0
    %1972 = vmatpush1.bf16.msra.mxu0 %v1433
    %1973 = vmatprep.subr.bf16.mxu0 0
    %1974 = vmatpush1.bf16.msra.mxu0 %v1434
    %1975 = vmatprep.subr.bf16.mxu0 0
    %1976 = vmatpush1.bf16.msra.mxu0 %v1435
    %1977 = vmatprep.subr.bf16.mxu0 0
    %1978 = vmatpush1.bf16.msra.mxu0 %v1436
    %1979 = vmatprep.subr.bf16.mxu0 0
    %1980 = vmatpush1.bf16.msra.mxu0 %v1437
    %1981 = vmatprep.subr.bf16.mxu0 0
    %1982 = vmatpush1.bf16.msra.mxu0 %v1438
    %1983 = vmatprep.subr.bf16.mxu0 0
    %1984 = vmatpush1.bf16.msra.mxu0 %v1439
    %1985 = vmatprep.subr.bf16.mxu0 0
    %1986 = vmatpush1.bf16.msra.mxu0 %v1440
    %1987 = vmatprep.subr.bf16.mxu0 0
    %1988 = vmatpush1.bf16.msra.mxu0 %v1441
    %1989 = vmatprep.subr.bf16.mxu0 0
    %1990 = vmatpush1.bf16.msra.mxu0 %v1442
    %1991 = vmatprep.subr.bf16.mxu0 0
    %1992 = vmatpush1.bf16.msra.mxu0 %v1443
    %1993 = vmatprep.subr.bf16.mxu0 0
    %1994 = vmatpush1.bf16.msra.mxu0 %v1444
    %1995 = vmatprep.mubr.bf16.mxu0 %v163
    %1996 = vmatmul.mubr.bf16.gmra.mrb[0].mxu0 %v162
    %v1997 = vpop.f32.mrb[0].mxu0
    %v1998 = vadd.f32 %v1957, %v1997
    %v1999 = vpop.f32.mrb[0].mxu0
    %v2000 = vpop.f32.mrb[0].mxu0
    %v2001 = vadd.f32 %v1960, %v2000
    %v2002 = vpop.f32.mrb[0].mxu0
    %2003 = vdwg.mxu0
    %2004 = vmatprep.subr.bf16.mxu0 0
    %2005 = vmatpush1.bf16.msra.mxu0 %v1445
    %2006 = vmatprep.subr.bf16.mxu0 0
    %2007 = vmatpush1.bf16.msra.mxu0 %v1446
    %2008 = vmatprep.subr.bf16.mxu0 0
    %2009 = vmatpush1.bf16.msra.mxu0 %v1447
    %2010 = vmatprep.subr.bf16.mxu0 0
    %2011 = vmatpush1.bf16.msra.mxu0 %v1448
    %2012 = vmatprep.subr.bf16.mxu0 0
    %2013 = vmatpush1.bf16.msra.mxu0 %v1449
    %2014 = vmatprep.subr.bf16.mxu0 0
    %2015 = vmatpush1.bf16.msra.mxu0 %v1450
    %2016 = vmatprep.subr.bf16.mxu0 0
    %2017 = vmatpush1.bf16.msra.mxu0 %v1451
    %2018 = vmatprep.subr.bf16.mxu0 0
    %2019 = vmatpush1.bf16.msra.mxu0 %v1452
    %2020 = vmatprep.subr.bf16.mxu0 0
    %2021 = vmatpush1.bf16.msra.mxu0 %v1453
    %2022 = vmatprep.subr.bf16.mxu0 0
    %2023 = vmatpush1.bf16.msra.mxu0 %v1454
    %2024 = vmatprep.subr.bf16.mxu0 0
    %2025 = vmatpush1.bf16.msra.mxu0 %v1455
    %2026 = vmatprep.subr.bf16.mxu0 0
    %2027 = vmatpush1.bf16.msra.mxu0 %v1456
    %2028 = vmatprep.subr.bf16.mxu0 0
    %2029 = vmatpush1.bf16.msra.mxu0 %v1457
    %2030 = vmatprep.subr.bf16.mxu0 0
    %2031 = vmatpush1.bf16.msra.mxu0 %v1458
    %2032 = vmatprep.subr.bf16.mxu0 0
    %2033 = vmatpush1.bf16.msra.mxu0 %v1459
    %2034 = vmatprep.subr.bf16.mxu0 0
    %2035 = vmatpush1.bf16.msra.mxu0 %v1460
    %2036 = vmatprep.mubr.bf16.mxu0 %v165
    %2037 = vmatmul.mubr.bf16.gmra.mrb[0].mxu0 %v164
    %v2038 = vpop.f32.mrb[0].mxu0
    %v2039 = vadd.f32 %v1998, %v2038
    %v2040 = vpop.f32.mrb[0].mxu0
    %v2041 = vpop.f32.mrb[0].mxu0
    %v2042 = vadd.f32 %v2001, %v2041
    %v2043 = vpop.f32.mrb[0].mxu0
    %2044 = vdwg.mxu0
    %2045 = vmatprep.subr.bf16.mxu0 0
    %2046 = vmatpush1.bf16.msra.mxu0 %v1461
    %2047 = vmatprep.subr.bf16.mxu0 0
    %2048 = vmatpush1.bf16.msra.mxu0 %v1462
    %2049 = vmatprep.subr.bf16.mxu0 0
    %2050 = vmatpush1.bf16.msra.mxu0 %v1463
    %2051 = vmatprep.subr.bf16.mxu0 0
    %2052 = vmatpush1.bf16.msra.mxu0 %v1464
    %2053 = vmatprep.subr.bf16.mxu0 0
    %2054 = vmatpush1.bf16.msra.mxu0 %v1465
    %2055 = vmatprep.subr.bf16.mxu0 0
    %2056 = vmatpush1.bf16.msra.mxu0 %v1466
    %2057 = vmatprep.subr.bf16.mxu0 0
    %2058 = vmatpush1.bf16.msra.mxu0 %v1467
    %2059 = vmatprep.subr.bf16.mxu0 0
    %2060 = vmatpush1.bf16.msra.mxu0 %v1468
    %2061 = vmatprep.subr.bf16.mxu0 0
    %2062 = vmatpush1.bf16.msra.mxu0 %v1469
    %2063 = vmatprep.subr.bf16.mxu0 0
    %2064 = vmatpush1.bf16.msra.mxu0 %v1470
    %2065 = vmatprep.subr.bf16.mxu0 0
    %2066 = vmatpush1.bf16.msra.mxu0 %v1471
    %2067 = vmatprep.subr.bf16.mxu0 0
    %2068 = vmatpush1.bf16.msra.mxu0 %v1472
    %2069 = vmatprep.subr.bf16.mxu0 0
    %2070 = vmatpush1.bf16.msra.mxu0 %v1473
    %2071 = vmatprep.subr.bf16.mxu0 0
    %2072 = vmatpush1.bf16.msra.mxu0 %v1474
    %2073 = vmatprep.subr.bf16.mxu0 0
    %2074 = vmatpush1.bf16.msra.mxu0 %v1475
    %2075 = vmatprep.subr.bf16.mxu0 0
    %2076 = vmatpush1.bf16.msra.mxu0 %v1476
    %2077 = vmatprep.mubr.bf16.mxu0 %v167
    %2078 = vmatmul.mubr.bf16.gmra.mrb[0].mxu0 %v166
    %v2079 = vpop.f32.mrb[0].mxu0
    %v2080 = vadd.f32 %v2039, %v2079
    %v2081 = vpop.f32.mrb[0].mxu0
    %v2082 = vpop.f32.mrb[0].mxu0
    %v2083 = vadd.f32 %v2042, %v2082
    %v2084 = vpop.f32.mrb[0].mxu0
    %2085 = vdwg.mxu0
    %2086 = vmatprep.subr.bf16.mxu0 0
    %2087 = vmatpush1.bf16.msra.mxu0 %v1477
    %2088 = vmatprep.subr.bf16.mxu0 0
    %2089 = vmatpush1.bf16.msra.mxu0 %v1478
    %2090 = vmatprep.subr.bf16.mxu0 0
    %2091 = vmatpush1.bf16.msra.mxu0 %v1479
    %2092 = vmatprep.subr.bf16.mxu0 0
    %2093 = vmatpush1.bf16.msra.mxu0 %v1480
    %2094 = vmatprep.subr.bf16.mxu0 0
    %2095 = vmatpush1.bf16.msra.mxu0 %v1481
    %2096 = vmatprep.subr.bf16.mxu0 0
    %2097 = vmatpush1.bf16.msra.mxu0 %v1482
    %2098 = vmatprep.subr.bf16.mxu0 0
    %2099 = vmatpush1.bf16.msra.mxu0 %v1483
    %2100 = vmatprep.subr.bf16.mxu0 0
    %2101 = vmatpush1.bf16.msra.mxu0 %v1484
    %2102 = vmatprep.subr.bf16.mxu0 0
    %2103 = vmatpush1.bf16.msra.mxu0 %v1485
    %2104 = vmatprep.subr.bf16.mxu0 0
    %2105 = vmatpush1.bf16.msra.mxu0 %v1486
    %2106 = vmatprep.subr.bf16.mxu0 0
    %2107 = vmatpush1.bf16.msra.mxu0 %v1487
    %2108 = vmatprep.subr.bf16.mxu0 0
    %2109 = vmatpush1.bf16.msra.mxu0 %v1488
    %2110 = vmatprep.subr.bf16.mxu0 0
    %2111 = vmatpush1.bf16.msra.mxu0 %v1489
    %2112 = vmatprep.subr.bf16.mxu0 0
    %2113 = vmatpush1.bf16.msra.mxu0 %v1490
    %2114 = vmatprep.subr.bf16.mxu0 0
    %2115 = vmatpush1.bf16.msra.mxu0 %v1491
    %2116 = vmatprep.subr.bf16.mxu0 0
    %2117 = vmatpush1.bf16.msra.mxu0 %v1492
    %2118 = vmatprep.mubr.bf16.mxu0 %v169
    %2119 = vmatmul.mubr.bf16.gmra.mrb[0].mxu0 %v168
    %v2120 = vpop.f32.mrb[0].mxu0
    %v2121 = vadd.f32 %v2080, %v2120
    %v2122 = vpop.f32.mrb[0].mxu0
    %v2123 = vpop.f32.mrb[0].mxu0
    %v2124 = vadd.f32 %v2083, %v2123
    %v2125 = vpop.f32.mrb[0].mxu0
    %2126 = vdwg.mxu0
    %2127 = vmatprep.subr.bf16.mxu0 0
    %2128 = vmatpush1.bf16.msra.mxu0 %v1493
    %2129 = vmatprep.subr.bf16.mxu0 0
    %2130 = vmatpush1.bf16.msra.mxu0 %v1494
    %2131 = vmatprep.subr.bf16.mxu0 0
    %2132 = vmatpush1.bf16.msra.mxu0 %v1495
    %2133 = vmatprep.subr.bf16.mxu0 0
    %2134 = vmatpush1.bf16.msra.mxu0 %v1496
    %2135 = vmatprep.subr.bf16.mxu0 0
    %2136 = vmatpush1.bf16.msra.mxu0 %v1497
    %2137 = vmatprep.subr.bf16.mxu0 0
    %2138 = vmatpush1.bf16.msra.mxu0 %v1498
    %2139 = vmatprep.subr.bf16.mxu0 0
    %2140 = vmatpush1.bf16.msra.mxu0 %v1499
    %2141 = vmatprep.subr.bf16.mxu0 0
    %2142 = vmatpush1.bf16.msra.mxu0 %v1500
    %2143 = vmatprep.subr.bf16.mxu0 0
    %2144 = vmatpush1.bf16.msra.mxu0 %v1501
    %2145 = vmatprep.subr.bf16.mxu0 0
    %2146 = vmatpush1.bf16.msra.mxu0 %v1502
    %2147 = vmatprep.subr.bf16.mxu0 0
    %2148 = vmatpush1.bf16.msra.mxu0 %v1503
    %2149 = vmatprep.subr.bf16.mxu0 0
    %2150 = vmatpush1.bf16.msra.mxu0 %v1504
    %2151 = vmatprep.subr.bf16.mxu0 0
    %2152 = vmatpush1.bf16.msra.mxu0 %v1505
    %2153 = vmatprep.subr.bf16.mxu0 0
    %2154 = vmatpush1.bf16.msra.mxu0 %v1506
    %2155 = vmatprep.subr.bf16.mxu0 0
    %2156 = vmatpush1.bf16.msra.mxu0 %v1507
    %2157 = vmatprep.subr.bf16.mxu0 0
    %2158 = vmatpush1.bf16.msra.mxu0 %v1508
    %2159 = vmatprep.mubr.bf16.mxu0 %v171
    %2160 = vmatmul.mubr.bf16.gmra.mrb[0].mxu0 %v170
    %v2161 = vpop.f32.mrb[0].mxu0
    %v2162 = vadd.f32 %v2121, %v2161
    %v2163 = vpop.f32.mrb[0].mxu0
    %v2164 = vpop.f32.mrb[0].mxu0
    %v2165 = vadd.f32 %v2124, %v2164
    %v2166 = vpop.f32.mrb[0].mxu0
    %2167 = vdwg.mxu0
    %2168 = vmatprep.subr.bf16.mxu0 0
    %2169 = vmatpush1.bf16.msra.mxu0 %v1509
    %2170 = vmatprep.subr.bf16.mxu0 0
    %2171 = vmatpush1.bf16.msra.mxu0 %v1510
    %2172 = vmatprep.subr.bf16.mxu0 0
    %2173 = vmatpush1.bf16.msra.mxu0 %v1511
    %2174 = vmatprep.subr.bf16.mxu0 0
    %2175 = vmatpush1.bf16.msra.mxu0 %v1512
    %2176 = vmatprep.subr.bf16.mxu0 0
    %2177 = vmatpush1.bf16.msra.mxu0 %v1513
    %2178 = vmatprep.subr.bf16.mxu0 0
    %2179 = vmatpush1.bf16.msra.mxu0 %v1514
    %2180 = vmatprep.subr.bf16.mxu0 0
    %2181 = vmatpush1.bf16.msra.mxu0 %v1515
    %2182 = vmatprep.subr.bf16.mxu0 0
    %2183 = vmatpush1.bf16.msra.mxu0 %v1516
    %2184 = vmatprep.subr.bf16.mxu0 0
    %2185 = vmatpush1.bf16.msra.mxu0 %v1517
    %2186 = vmatprep.subr.bf16.mxu0 0
    %2187 = vmatpush1.bf16.msra.mxu0 %v1518
    %2188 = vmatprep.subr.bf16.mxu0 0
    %2189 = vmatpush1.bf16.msra.mxu0 %v1519
    %2190 = vmatprep.subr.bf16.mxu0 0
    %2191 = vmatpush1.bf16.msra.mxu0 %v1520
    %2192 = vmatprep.subr.bf16.mxu0 0
    %2193 = vmatpush1.bf16.msra.mxu0 %v1521
    %2194 = vmatprep.subr.bf16.mxu0 0
    %2195 = vmatpush1.bf16.msra.mxu0 %v1522
    %2196 = vmatprep.subr.bf16.mxu0 0
    %2197 = vmatpush1.bf16.msra.mxu0 %v1523
    %2198 = vmatprep.subr.bf16.mxu0 0
    %2199 = vmatpush1.bf16.msra.mxu0 %v1524
    %2200 = vmatprep.mubr.bf16.mxu0 %v173
    %2201 = vmatmul.mubr.bf16.gmra.mrb[0].mxu0 %v172
    %v2202 = vpop.f32.mrb[0].mxu0
    %v2203 = vadd.f32 %v2162, %v2202
    %v2204 = vpop.f32.mrb[0].mxu0
    %v2205 = vpop.f32.mrb[0].mxu0
    %v2206 = vadd.f32 %v2165, %v2205
    %v2207 = vpop.f32.mrb[0].mxu0
    %2208 = vdwg.mxu0
    %v2209 = vmax.f32 %v2203, 0.0
    %v2210 = vmax.f32 %v2206, 0.0
    %v2211 = vpack.c.bf16 %v2210, %v2209
    %v2212 = vld [vmem:[#allocation7] sm:$0xf]
    %v2213 = vld [vmem:[#allocation7 + $0x4] sm:$0xf]
    %v2214 = vld [vmem:[#allocation7 + $0x8] sm:$0xf]
    %v2215 = vld [vmem:[#allocation7 + $0xc] sm:$0xf]
    %v2216 = vld [vmem:[#allocation7 + $0x10] sm:$0xf]
    %v2217 = vld [vmem:[#allocation7 + $0x14] sm:$0xf]
    %v2218 = vld [vmem:[#allocation7 + $0x18] sm:$0xf]
    %v2219 = vld [vmem:[#allocation7 + $0x1c] sm:$0xf]
    %v2220 = vld [vmem:[#allocation7 + $0x20] sm:$0xf]
    %v2221 = vld [vmem:[#allocation7 + $0x24] sm:$0xf]
    %v2222 = vld [vmem:[#allocation7 + $0x28] sm:$0xf]
    %v2223 = vld [vmem:[#allocation7 + $0x2c] sm:$0xf]
    %v2224 = vld [vmem:[#allocation7 + $0x30] sm:$0xf]
    %v2225 = vld [vmem:[#allocation7 + $0x34] sm:$0xf]
    %v2226 = vld [vmem:[#allocation7 + $0x38] sm:$0xf]
    %v2227 = vld [vmem:[#allocation7 + $0x3c] sm:$0xf]
    %v2228 = vld [vmem:[%s4] sm:$0x1]
    %v2230 = vlaneseq
    %v2231 = vshrl.u32 %v2230, 7
    %v2232 = vsub.s32 0, %v2231
    %v2233 = vrot.slane %v2228, %v2232
    %v2251 = vunpack.c.l.b16 %v2212
    %v2252 = vunpack.c.l.b16 %v2213
    %v2253 = vunpack.c.l.b16 %v2214
    %v2254 = vunpack.c.l.b16 %v2215
    %v2255 = vunpack.c.l.b16 %v2216
    %v2256 = vunpack.c.l.b16 %v2217
    %v2257 = vunpack.c.l.b16 %v2218
    %v2258 = vunpack.c.l.b16 %v2219
    %v2259 = vunpack.c.l.b16 %v2220
    %v2260 = vunpack.c.l.b16 %v2221
    %v2261 = vunpack.c.l.b16 %v2222
    %v2262 = vunpack.c.l.b16 %v2223
    %v2263 = vunpack.c.l.b16 %v2224
    %v2264 = vunpack.c.l.b16 %v2225
    %v2265 = vunpack.c.l.b16 %v2226
    %v2266 = vunpack.c.l.b16 %v2227
    %v2267 = vpack.c.b16 %v2252, %v2251
    %v2268 = vpack.c.b16 %v2254, %v2253
    %v2269 = vpack.c.b16 %v2256, %v2255
    %v2270 = vpack.c.b16 %v2258, %v2257
    %v2271 = vpack.c.b16 %v2260, %v2259
    %v2272 = vpack.c.b16 %v2262, %v2261
    %v2273 = vpack.c.b16 %v2264, %v2263
    %v2274 = vpack.c.b16 %v2266, %v2265
    %2283 = vmatprep.subr.bf16.mxu0 0
    %2284 = vmatpush1.bf16.msra.mxu0 %v2267
    %2285 = vmatprep.subr.bf16.mxu0 0
    %2286 = vmatpush1.bf16.msra.mxu0 %v2268
    %2287 = vmatprep.subr.bf16.mxu0 0
    %2288 = vmatpush1.bf16.msra.mxu0 %v2269
    %2289 = vmatprep.subr.bf16.mxu0 0
    %2290 = vmatpush1.bf16.msra.mxu0 %v2270
    %2291 = vmatprep.subr.bf16.mxu0 0
    %2292 = vmatpush1.bf16.msra.mxu0 %v2271
    %2293 = vmatprep.subr.bf16.mxu0 0
    %2294 = vmatpush1.bf16.msra.mxu0 %v2272
    %2295 = vmatprep.subr.bf16.mxu0 0
    %2296 = vmatpush1.bf16.msra.mxu0 %v2273
    %2297 = vmatprep.subr.bf16.mxu0 0
    %2298 = vmatpush1.bf16.msra.mxu0 %v2274
    %2299 = vmatprep.subr.bf16.mxu0 0
    %2300 = vmatpush1.bf16.msra.mxu0 0
    %2301 = vmatprep.subr.bf16.mxu0 0
    %2302 = vmatpush1.bf16.msra.mxu0 0
    %2303 = vmatprep.subr.bf16.mxu0 0
    %2304 = vmatpush1.bf16.msra.mxu0 0
    %2305 = vmatprep.subr.bf16.mxu0 0
    %2306 = vmatpush1.bf16.msra.mxu0 0
    %2307 = vmatprep.subr.bf16.mxu0 0
    %2308 = vmatpush1.bf16.msra.mxu0 0
    %2309 = vmatprep.subr.bf16.mxu0 0
    %2310 = vmatpush1.bf16.msra.mxu0 0
    %2311 = vmatprep.subr.bf16.mxu0 0
    %2312 = vmatpush1.bf16.msra.mxu0 0
    %2313 = vmatprep.subr.bf16.mxu0 0
    %2314 = vmatpush1.bf16.msra.mxu0 0
    %2315 = vmatprep.mubr.bf16.mxu0 0
    %2316 = vmatmul.mubr.bf16.gmra.mrb[0].mxu0 %v2211
    %v2317 = vpop.f32.mrb[0].mxu0
    %v2318 = vadd.f32 %v2233, %v2317
    %v2319 = vpop.f32.mrb[0].mxu0
    %v2320 = vpop.f32.mrb[0].mxu0
    %v2321 = vadd.f32 %v2233, %v2320
    %v2322 = vpop.f32.mrb[0].mxu0
    %2323 = vdwg.mxu0
    %v2324 = vmax.f32 %v2318, 0.0
    %v2325 = vmax.f32 %v2321, 0.0
    %v2326 = vpack.c.bf16 %v2325, %v2324
    %v2327 = vld [vmem:[#allocation8] sm:$0xf]
    %v2328 = vld [vmem:[#allocation8 + $0x4] sm:$0xf]
    %v2329 = vld [vmem:[#allocation8 + $0x8] sm:$0xf]
    %v2330 = vld [vmem:[#allocation8 + $0xc] sm:$0xf]
    %v2331 = vld [vmem:[#allocation8 + $0x10] sm:$0xf]
    %v2332 = vld [vmem:[#allocation8 + $0x14] sm:$0xf]
    %v2333 = vld [vmem:[#allocation8 + $0x18] sm:$0xf]
    %v2334 = vld [vmem:[#allocation8 + $0x1c] sm:$0xf]
    %v2335 = vld [vmem:[#allocation8 + $0x20] sm:$0xf]
    %v2336 = vld [vmem:[#allocation8 + $0x24] sm:$0xf]
    %v2337 = vld [vmem:[#allocation8 + $0x28] sm:$0xf]
    %v2338 = vld [vmem:[#allocation8 + $0x2c] sm:$0xf]
    %v2339 = vld [vmem:[#allocation8 + $0x30] sm:$0xf]
    %v2340 = vld [vmem:[#allocation8 + $0x34] sm:$0xf]
    %v2341 = vld [vmem:[#allocation8 + $0x38] sm:$0xf]
    %v2342 = vld [vmem:[#allocation8 + $0x3c] sm:$0xf]
    %v2343 = vld [vmem:[%s6] sm:$0x1]
    %v2345 = vlaneseq
    %v2346 = vshrl.u32 %v2345, 7
    %v2347 = vsub.s32 0, %v2346
    %v2348 = vrot.slane %v2343, %v2347
    %v2366 = vunpack.c.l.b16 %v2327
    %v2367 = vunpack.c.l.b16 %v2328
    %v2368 = vunpack.c.l.b16 %v2329
    %v2369 = vunpack.c.l.b16 %v2330
    %v2370 = vunpack.c.l.b16 %v2331
    %v2371 = vunpack.c.l.b16 %v2332
    %v2372 = vunpack.c.l.b16 %v2333
    %v2373 = vunpack.c.l.b16 %v2334
    %v2374 = vunpack.c.l.b16 %v2335
    %v2375 = vunpack.c.l.b16 %v2336
    %v2376 = vunpack.c.l.b16 %v2337
    %v2377 = vunpack.c.l.b16 %v2338
    %v2378 = vunpack.c.l.b16 %v2339
    %v2379 = vunpack.c.l.b16 %v2340
    %v2380 = vunpack.c.l.b16 %v2341
    %v2381 = vunpack.c.l.b16 %v2342
    %v2382 = vpack.c.b16 %v2367, %v2366
    %v2383 = vpack.c.b16 %v2369, %v2368
    %v2384 = vpack.c.b16 %v2371, %v2370
    %v2385 = vpack.c.b16 %v2373, %v2372
    %v2386 = vpack.c.b16 %v2375, %v2374
    %v2387 = vpack.c.b16 %v2377, %v2376
    %v2388 = vpack.c.b16 %v2379, %v2378
    %v2389 = vpack.c.b16 %v2381, %v2380
    %2398 = vmatprep.subr.bf16.mxu0 0
    %2399 = vmatpush1.bf16.msra.mxu0 %v2382
    %2400 = vmatprep.subr.bf16.mxu0 0
    %2401 = vmatpush1.bf16.msra.mxu0 %v2383
    %2402 = vmatprep.subr.bf16.mxu0 0
    %2403 = vmatpush1.bf16.msra.mxu0 %v2384
    %2404 = vmatprep.subr.bf16.mxu0 0
    %2405 = vmatpush1.bf16.msra.mxu0 %v2385
    %2406 = vmatprep.subr.bf16.mxu0 0
    %2407 = vmatpush1.bf16.msra.mxu0 %v2386
    %2408 = vmatprep.subr.bf16.mxu0 0
    %2409 = vmatpush1.bf16.msra.mxu0 %v2387
    %2410 = vmatprep.subr.bf16.mxu0 0
    %2411 = vmatpush1.bf16.msra.mxu0 %v2388
    %2412 = vmatprep.subr.bf16.mxu0 0
    %2413 = vmatpush1.bf16.msra.mxu0 %v2389
    %2414 = vmatprep.subr.bf16.mxu0 0
    %2415 = vmatpush1.bf16.msra.mxu0 0
    %2416 = vmatprep.subr.bf16.mxu0 0
    %2417 = vmatpush1.bf16.msra.mxu0 0
    %2418 = vmatprep.subr.bf16.mxu0 0
    %2419 = vmatpush1.bf16.msra.mxu0 0
    %2420 = vmatprep.subr.bf16.mxu0 0
    %2421 = vmatpush1.bf16.msra.mxu0 0
    %2422 = vmatprep.subr.bf16.mxu0 0
    %2423 = vmatpush1.bf16.msra.mxu0 0
    %2424 = vmatprep.subr.bf16.mxu0 0
    %2425 = vmatpush1.bf16.msra.mxu0 0
    %2426 = vmatprep.subr.bf16.mxu0 0
    %2427 = vmatpush1.bf16.msra.mxu0 0
    %2428 = vmatprep.subr.bf16.mxu0 0
    %2429 = vmatpush1.bf16.msra.mxu0 0
    %2430 = vmatprep.mubr.bf16.mxu0 0
    %2431 = vmatmul.mubr.bf16.gmra.mrb[0].mxu0 %v2326
    %v2432 = vpop.f32.mrb[0].mxu0
    %v2433 = vadd.f32 %v2348, %v2432
    %v2434 = vpop.f32.mrb[0].mxu0
    %v2435 = vpop.f32.mrb[0].mxu0
    %v2436 = vadd.f32 %v2348, %v2435
    %v2437 = vpop.f32.mrb[0].mxu0
    %2438 = vdwg.mxu0
    %v2439 = vmax.f32 %v2433, 0.0
    %v2440 = vmax.f32 %v2436, 0.0
    %v2441 = vpack.c.bf16 %v2440, %v2439
    %v2442 = vld [vmem:[#allocation10] sm:$0xf]
    %v2443 = vld [vmem:[#allocation10 + $0x4] sm:$0xf]
    %v2444 = vld [vmem:[#allocation10 + $0x8] sm:$0xf]
    %v2445 = vld [vmem:[#allocation10 + $0xc] sm:$0xf]
    %v2446 = vld [vmem:[#allocation10 + $0x10] sm:$0xf]
    %v2447 = vld [vmem:[#allocation10 + $0x14] sm:$0xf]
    %v2448 = vld [vmem:[#allocation10 + $0x18] sm:$0xf]
    %v2449 = vld [vmem:[#allocation10 + $0x1c] sm:$0xf]
    %v2450 = vld [vmem:[#allocation10 + $0x20] sm:$0xf]
    %v2451 = vld [vmem:[#allocation10 + $0x24] sm:$0xf]
    %v2452 = vld [vmem:[#allocation10 + $0x28] sm:$0xf]
    %v2453 = vld [vmem:[#allocation10 + $0x2c] sm:$0xf]
    %v2454 = vld [vmem:[#allocation10 + $0x30] sm:$0xf]
    %v2455 = vld [vmem:[#allocation10 + $0x34] sm:$0xf]
    %v2456 = vld [vmem:[#allocation10 + $0x38] sm:$0xf]
    %v2457 = vld [vmem:[#allocation10 + $0x3c] sm:$0xf]
    %v2458 = vld [vmem:[%s8] sm:$0x1]
    %v2460 = vlaneseq
    %v2461 = vshrl.u32 %v2460, 7
    %v2462 = vsub.s32 0, %v2461
    %v2463 = vrot.slane %v2458, %v2462
    %v2481 = vunpack.c.l.b16 %v2442
    %v2482 = vunpack.c.l.b16 %v2443
    %v2483 = vunpack.c.l.b16 %v2444
    %v2484 = vunpack.c.l.b16 %v2445
    %v2485 = vunpack.c.l.b16 %v2446
    %v2486 = vunpack.c.l.b16 %v2447
    %v2487 = vunpack.c.l.b16 %v2448
    %v2488 = vunpack.c.l.b16 %v2449
    %v2489 = vunpack.c.l.b16 %v2450
    %v2490 = vunpack.c.l.b16 %v2451
    %v2491 = vunpack.c.l.b16 %v2452
    %v2492 = vunpack.c.l.b16 %v2453
    %v2493 = vunpack.c.l.b16 %v2454
    %v2494 = vunpack.c.l.b16 %v2455
    %v2495 = vunpack.c.l.b16 %v2456
    %v2496 = vunpack.c.l.b16 %v2457
    %v2497 = vpack.c.b16 %v2482, %v2481
    %v2498 = vpack.c.b16 %v2484, %v2483
    %v2499 = vpack.c.b16 %v2486, %v2485
    %v2500 = vpack.c.b16 %v2488, %v2487
    %v2501 = vpack.c.b16 %v2490, %v2489
    %v2502 = vpack.c.b16 %v2492, %v2491
    %v2503 = vpack.c.b16 %v2494, %v2493
    %v2504 = vpack.c.b16 %v2496, %v2495
    %2513 = vmatprep.subr.bf16.mxu0 0
    %2514 = vmatpush1.bf16.msra.mxu0 %v2497
    %2515 = vmatprep.subr.bf16.mxu0 0
    %2516 = vmatpush1.bf16.msra.mxu0 %v2498
    %2517 = vmatprep.subr.bf16.mxu0 0
    %2518 = vmatpush1.bf16.msra.mxu0 %v2499
    %2519 = vmatprep.subr.bf16.mxu0 0
    %2520 = vmatpush1.bf16.msra.mxu0 %v2500
    %2521 = vmatprep.subr.bf16.mxu0 0
    %2522 = vmatpush1.bf16.msra.mxu0 %v2501
    %2523 = vmatprep.subr.bf16.mxu0 0
    %2524 = vmatpush1.bf16.msra.mxu0 %v2502
    %2525 = vmatprep.subr.bf16.mxu0 0
    %2526 = vmatpush1.bf16.msra.mxu0 %v2503
    %2527 = vmatprep.subr.bf16.mxu0 0
    %2528 = vmatpush1.bf16.msra.mxu0 %v2504
    %2529 = vmatprep.subr.bf16.mxu0 0
    %2530 = vmatpush1.bf16.msra.mxu0 0
    %2531 = vmatprep.subr.bf16.mxu0 0
    %2532 = vmatpush1.bf16.msra.mxu0 0
    %2533 = vmatprep.subr.bf16.mxu0 0
    %2534 = vmatpush1.bf16.msra.mxu0 0
    %2535 = vmatprep.subr.bf16.mxu0 0
    %2536 = vmatpush1.bf16.msra.mxu0 0
    %2537 = vmatprep.subr.bf16.mxu0 0
    %2538 = vmatpush1.bf16.msra.mxu0 0
    %2539 = vmatprep.subr.bf16.mxu0 0
    %2540 = vmatpush1.bf16.msra.mxu0 0
    %2541 = vmatprep.subr.bf16.mxu0 0
    %2542 = vmatpush1.bf16.msra.mxu0 0
    %2543 = vmatprep.subr.bf16.mxu0 0
    %2544 = vmatpush1.bf16.msra.mxu0 0
    %2545 = vmatprep.mubr.bf16.mxu0 0
    %2546 = vmatmul.mubr.bf16.gmra.mrb[0].mxu0 %v2441
    %v2547 = vpop.f32.mrb[0].mxu0
    %v2548 = vadd.f32 %v2463, %v2547
    %v2549 = vpop.f32.mrb[0].mxu0
    %v2550 = vpop.f32.mrb[0].mxu0
    %v2551 = vadd.f32 %v2463, %v2550
    %v2552 = vpop.f32.mrb[0].mxu0
    %2553 = vdwg.mxu0
    %2554 = vst [vmem:[#allocation11] sm:$0xff] %v2548
    %2555 = vst [vmem:[#allocation11 + $0x8] sm:$0xff] %v2551
    // Predicated region
    $region58: #{tpu_custom_call.1} parent=1 // pred_check
      _
    $region59: #{tpu_custom_call.1} parent=1 // pred_check_branch
      %2557 = sbr.rel (0) target = $region61
    $region60: #{tpu_custom_call.1} parent=1 // pred_region
      %s2559 = ssub.s32 256, 256
      %2560 = vsyncadd [#allocation4], %s2559
      %s2561 = sshll.u32 [#allocation11], 4
      %s2562 = int_to_ptr.vmem [resolvable:$true] %s2561
      %2567 = dma.vmem_to_hbm [thread:$0]  %s2562, 256, %s9, [#allocation4], 128, 128, 8
    $region61: #{tpu_custom_call.1} parent=1 // pred_fallthru
      _
    // Predicated region
    $region62: #{tpu_custom_call.1} parent=1 // pred_check
      _
    $region63: #{tpu_custom_call.1} parent=1 // pred_check_branch
      %2569 = sbr.rel (0) target = $region65
    $region64: #{tpu_custom_call.1} parent=1 // pred_region
      %2570 = dma.done [#allocation4], 256
    $region65: #{tpu_custom_call.1} parent=1 // pred_fallthru
      _
    %2571 = vsyncpa [#allocation3], 1
    %2572 = vsyncpa [#allocation6], 1
    %2573 = vsyncpa [#allocation9], 1
    %2574 = vsyncpa [#allocation4], 1

</llo_original>
